<compile_context>
chip_gen: v5e
topology: v5e:2x2
jax: 0.10.0
libtpu: 0.0.40
codegen_flags: <defaults>
</compile_context>

<pallas_src>
import jax
import jax.numpy as jnp
from jax import lax
from jax.experimental import pallas as pl
from jax.experimental.pallas import tpu as pltpu


def _full_spec(shape):
    # Whole array resident in VMEM; grid-less pallas_call -> zero-arg index_map.
    return pl.BlockSpec(shape, lambda: (0,) * len(shape))


def _make_fused_lstm_fc_kernel(T, B, D, H, O, num_layers, compute_dtype, unroll):
    """Fused kernel: stacked input projections + serial recurrences + FC head."""
    G = 4 * H

    def run_layer(pre_ref, whh, hseq_ref, write_hseq):
        # pre_ref[t] already holds x_t @ W_ih + (b_ih + b_hh) for every t,
        # so the per-step dependent work is a single (B,H)@(H,4H) matmul.
        def step(t, carry):
            h, c = carry                                       # f32 (B, H)
            gates = pre_ref[t] + jnp.dot(
                h.astype(compute_dtype), whh,
                preferred_element_type=jnp.float32)            # f32 (B, 4H)
            # Full-width activations (2 EUP pushes), then slice gate blocks.
            sig = jax.nn.sigmoid(gates)
            tng = jnp.tanh(gates)
            i_g = sig[:, 0 * H:1 * H]
            f_g = sig[:, 1 * H:2 * H]
            g_g = tng[:, 2 * H:3 * H]
            o_g = sig[:, 3 * H:4 * H]
            c_new = f_g * c + i_g * g_g
            h_new = o_g * jnp.tanh(c_new)
            if write_hseq:  # static flag: last layer only needs h at t = T-1
                hseq_ref[t] = h_new.astype(hseq_ref.dtype)
            return (h_new, c_new)

        h0 = jnp.zeros((B, H), jnp.float32)
        c0 = jnp.zeros((B, H), jnp.float32)
        h_last, _ = lax.fori_loop(0, T, step, (h0, c0), unroll=unroll)
        return h_last

    def kernel(*refs):
        idx = 0
        x_ref = refs[idx]; idx += 1                   # (T, B, D)  compute_dtype
        layer_refs = []
        for _ in range(num_layers):                   # (d_in,4H), (H,4H), (1,4H)
            layer_refs.append((refs[idx], refs[idx + 1], refs[idx + 2]))
            idx += 3
        wfc_ref = refs[idx]; idx += 1                 # (H, O)
        bfc_ref = refs[idx]; idx += 1                 # (1, O)
        out_ref = refs[idx]; idx += 1                 # (B, O)
        pre_ref = refs[idx]; idx += 1                 # VMEM (T, B, 4H) f32
        hseq_ref = refs[idx]; idx += 1                # VMEM (T, B, H) compute_dtype

        # ---- layer 0: fused, stacked input projection (T*B, D) @ (D, 4H)
        wih0_ref, whh0_ref, b0_ref = layer_refs[0]
        x_flat = x_ref[...].reshape(T * B, D)
        pre0 = jnp.dot(x_flat, wih0_ref[...],
                       preferred_element_type=jnp.float32) + b0_ref[...]
        pre_ref[...] = pre0.reshape(T, B, G)
        h_last = run_layer(pre_ref, whh0_ref[...], hseq_ref,
                           write_hseq=(num_layers > 1))

        # ---- layers 1..L-1: one stacked (T*B,H)@(H,4H) projection per layer,
        #      then the serial recurrence (hseq is consumed before overwrite).
        for layer in range(1, num_layers):
            wih_ref, whh_ref, b_ref = layer_refs[layer]
            hs_flat = hseq_ref[...].reshape(T * B, H)
            pre_l = jnp.dot(hs_flat, wih_ref[...],
                            preferred_element_type=jnp.float32) + b_ref[...]
            pre_ref[...] = pre_l.reshape(T, B, G)
            h_last = run_layer(pre_ref, whh_ref[...], hseq_ref,
                               write_hseq=(layer < num_layers - 1))

        # ---- FC head: only the final hidden state is consumed.
        out_ref[...] = (
            jnp.dot(h_last.astype(compute_dtype), wfc_ref[...],
                    preferred_element_type=jnp.float32) + bfc_ref[...])

    return kernel


def lstm_anomaly_detector(params, x, *, compute_dtype=jnp.bfloat16):
    """x: (B, T, input_dim) batch_first, matching the PyTorch module.
    Returns (B, output_dim) in float32."""
    x = x.astype(jnp.float32)
    B, T, D = x.shape
    lstm_params = params["lstm"]
    num_layers = len(lstm_params)
    H = lstm_params[0][1].shape[0]
    w_fc, b_fc = params["fc"]
    O = w_fc.shape[1]

    # Time-major input; matmul operands in the MXU-native dtype, biases stay
    # f32 (they add into the f32 accumulation path).
    x_t = jnp.transpose(x, (1, 0, 2)).astype(compute_dtype)   # (T, B, D)

    inputs = [x_t]
    for (w_ih, w_hh, b) in lstm_params:
        inputs += [w_ih.astype(compute_dtype),
                   w_hh.astype(compute_dtype),
                   b.astype(jnp.float32)]
    inputs += [w_fc.astype(compute_dtype), b_fc.astype(jnp.float32)]

    kernel = _make_fused_lstm_fc_kernel(
        T, B, D, H, O, num_layers, compute_dtype, unroll=(T <= 16))

    scratch_shapes = [
        pltpu.VMEM((T, B, 4 * H), jnp.float32),    # per-layer gate pre-activations
        pltpu.VMEM((T, B, H), compute_dtype),      # per-layer hidden sequence
    ]

    # Resident-VMEM budget with headroom; keep the limit explicit so the fused
    # design is validated against v7x's 64 MiB VMEM (not the 128 MiB of v5e/v6e).
    cdt_bytes = jnp.dtype(compute_dtype).itemsize
    est_bytes = (sum(a.size * a.dtype.itemsize for a in inputs)
                 + B * O * 4
                 + T * B * 4 * H * 4
                 + T * B * H * cdt_bytes)
    vmem_limit = int(min(64 * 1024 * 1024,
                         max(16 * 1024 * 1024, 2 * est_bytes + (1 << 20))))

    return pl.pallas_call(
        kernel,
        out_shape=jax.ShapeDtypeStruct((B, O), jnp.float32),
        in_specs=[_full_spec(a.shape) for a in inputs],
        out_specs=_full_spec((B, O)),
        scratch_shapes=scratch_shapes,
        compiler_params=pltpu.CompilerParams(vmem_limit_bytes=vmem_limit),
    )(*inputs)


# ----------------------------------------------------------------------------
# Parameter init (PyTorch default: U(-1/sqrt(H), 1/sqrt(H)) for all LSTM and
# Linear params) — deterministic with PRNGKey-derived keys.
# ----------------------------------------------------------------------------
def init_params(key, input_dim, hidden_dim, num_layers, output_dim):
    params = {"lstm": [], "fc": None}
    bound = 1.0 / jnp.sqrt(jnp.float32(hidden_dim))
    for layer in range(num_layers):
        d_in = input_dim if layer == 0 else hidden_dim
        key, k1, k2, k3, k4 = jax.random.split(key, 5)
        # Stored pre-transposed relative to PyTorch (which keeps (4H, d_in)).
        w_ih = jax.random.uniform(k1, (d_in, 4 * hidden_dim), jnp.float32,
                                  -bound, bound)
        w_hh = jax.random.uniform(k2, (hidden_dim, 4 * hidden_dim), jnp.float32,
                                  -bound, bound)
        b_ih = jax.random.uniform(k3, (4 * hidden_dim,), jnp.float32, -bound, bound)
        b_hh = jax.random.uniform(k4, (4 * hidden_dim,), jnp.float32, -bound, bound)
        bias = (b_ih + b_hh).reshape(1, 4 * hidden_dim)
        params["lstm"].append((w_ih, w_hh, bias))
    key, k5, k6 = jax.random.split(key, 3)
    w_fc = jax.random.uniform(k5, (hidden_dim, output_dim), jnp.float32,
                              -bound, bound)
    b_fc = jax.random.uniform(k6, (1, output_dim), jnp.float32, -bound, bound)
    params["fc"] = (w_fc, b_fc)
    return params


# Pure-JAX f32 reference (same math, PyTorch gate order i,f,g,o).
def _reference_forward(params, x):
    x = x.astype(jnp.float32)
    B, T, _ = x.shape
    seq = jnp.transpose(x, (1, 0, 2))          # (T, B, D)
    for (w_ih, w_hh, b) in params["lstm"]:
        H = w_hh.shape[0]
        h = jnp.zeros((B, H), jnp.float32)
        c = jnp.zeros((B, H), jnp.float32)
        outs = []
        for t in range(T):
            gates = seq[t] @ w_ih + h @ w_hh + b
            i = jax.nn.sigmoid(gates[:, :H])
            f = jax.nn.sigmoid(gates[:, H:2 * H])
            g = jnp.tanh(gates[:, 2 * H:3 * H])
            o = jax.nn.sigmoid(gates[:, 3 * H:])
            c = f * c + i * g
            h = o * jnp.tanh(c)
            outs.append(h)
        seq = jnp.stack(outs, axis=0)
    w_fc, b_fc = params["fc"]
    return seq[-1] @ w_fc + b_fc


if __name__ == "__main__":
    batch, seq_len = 2, 8
    input_dim, hidden_dim, num_layers, output_dim = 4, 32, 2, 1

    key = jax.random.PRNGKey(0)
    key, pkey, xkey = jax.random.split(key, 3)
    params = init_params(pkey, input_dim, hidden_dim, num_layers, output_dim)
    x = jax.random.normal(xkey, (batch, seq_len, input_dim), jnp.float32)

    y = jax.jit(lstm_anomaly_detector)(params, x)
    jax.block_until_ready(y)
    assert y.shape == (batch, output_dim)

    y_ref = _reference_forward(params, x)
    # bf16 matmul operands (f32 accumulation) vs. pure-f32 reference.
    assert jnp.allclose(y, y_ref, atol=2e-2, rtol=2e-2), (y, y_ref)
    print("KERNEL_OK")
</pallas_src>

<mosaic_0001>
module attributes {stable_mosaic.version = 11 : i64} {
  func.func @kernel(%arg0: memref<8x2x4xbf16, #tpu.memory_space<vmem>>, %arg1: memref<4x128xbf16, #tpu.memory_space<vmem>>, %arg2: memref<32x128xbf16, #tpu.memory_space<vmem>>, %arg3: memref<1x128xf32, #tpu.memory_space<vmem>>, %arg4: memref<32x128xbf16, #tpu.memory_space<vmem>>, %arg5: memref<32x128xbf16, #tpu.memory_space<vmem>>, %arg6: memref<1x128xf32, #tpu.memory_space<vmem>>, %arg7: memref<32x1xbf16, #tpu.memory_space<vmem>>, %arg8: memref<1x1xf32, #tpu.memory_space<vmem>>, %arg9: memref<2x1xf32, #tpu.memory_space<vmem>>, %arg10: memref<8x2x128xf32, #tpu.memory_space<vmem>>, %arg11: memref<8x2x32xbf16, #tpu.memory_space<vmem>>) attributes {dimension_semantics = [], scalar_prefetch = 0 : i64, scratch_operands = 2 : i64, tpu.core_type = #tpu.core_type<tc>} {
    %c0 = arith.constant 0 : index
    %c0_0 = arith.constant 0 : index
    %c0_1 = arith.constant 0 : index
    %0 = vector.load %arg0[%c0, %c0_0, %c0_1] : memref<8x2x4xbf16, #tpu.memory_space<vmem>>, vector<8x2x4xbf16>
    %1 = vector.shape_cast %0 : vector<8x2x4xbf16> to vector<16x4xbf16>
    %c0_2 = arith.constant 0 : index
    %c0_3 = arith.constant 0 : index
    %2 = vector.load %arg1[%c0_2, %c0_3] : memref<4x128xbf16, #tpu.memory_space<vmem>>, vector<4x128xbf16>
    %cst = arith.constant dense<0.000000e+00> : vector<16x128xf32>
    %3 = tpu.matmul %1, %2, %cst {dimension_numbers = #tpu.dot_dimension_numbers<[1], [0], [0], [1], [0, 0, 1, 1], [], []>} : vector<16x4xbf16>, vector<4x128xbf16>, vector<16x128xf32> -> vector<16x128xf32>
    %c0_4 = arith.constant 0 : index
    %c0_5 = arith.constant 0 : index
    %4 = vector.load %arg3[%c0_4, %c0_5] : memref<1x128xf32, #tpu.memory_space<vmem>>, vector<1x128xf32>
    %5 = vector.broadcast %4 : vector<1x128xf32> to vector<16x128xf32>
    %6 = arith.addf %3, %5 : vector<16x128xf32>
    %7 = vector.shape_cast %6 : vector<16x128xf32> to vector<8x2x128xf32>
    %c0_6 = arith.constant 0 : index
    %c0_7 = arith.constant 0 : index
    %c0_8 = arith.constant 0 : index
    %8 = vector.load %arg10[%c0_6, %c0_7, %c0_8] : memref<8x2x128xf32, #tpu.memory_space<vmem>>, vector<8x2x128xf32>
    tpu.vector_store %arg10[%c0_6, %c0_7, %c0_8], %7 {strides = array<i32>} : memref<8x2x128xf32, #tpu.memory_space<vmem>>, vector<8x2x128xf32>,
    %c0_9 = arith.constant 0 : index
    %c0_10 = arith.constant 0 : index
    %9 = vector.load %arg2[%c0_9, %c0_10] : memref<32x128xbf16, #tpu.memory_space<vmem>>, vector<32x128xbf16>
    %cst_11 = arith.constant 0.000000e+00 : f32
    %10 = vector.broadcast %cst_11 : f32 to vector<2x32xf32>
    %cst_12 = arith.constant 0.000000e+00 : f32
    %11 = vector.broadcast %cst_12 : f32 to vector<2x32xf32>
    %c0_i32 = arith.constant 0 : i32
    %12 = arith.index_cast %c0_i32 : i32 to index
    %c0_13 = arith.constant 0 : index
    %c0_14 = arith.constant 0 : index
    %13 = vector.load %arg10[%12, %c0_13, %c0_14] : memref<8x2x128xf32, #tpu.memory_space<vmem>>, vector<1x2x128xf32>
    %14 = vector.shape_cast %13 : vector<1x2x128xf32> to vector<2x128xf32>
    %15 = arith.truncf %10 : vector<2x32xf32> to vector<2x32xbf16>
    %cst_15 = arith.constant dense<0.000000e+00> : vector<2x128xf32>
    %16 = tpu.matmul %15, %9, %cst_15 {dimension_numbers = #tpu.dot_dimension_numbers<[1], [0], [0], [1], [0, 0, 1, 1], [], []>} : vector<2x32xbf16>, vector<32x128xbf16>, vector<2x128xf32> -> vector<2x128xf32>
    %17 = arith.addf %14, %16 : vector<2x128xf32>
    %18 = arith.negf %17 : vector<2x128xf32>
    %19 = math.exp %18 : vector<2x128xf32>
    %cst_16 = arith.constant 1.000000e+00 : f32
    %20 = vector.broadcast %cst_16 : f32 to vector<2x128xf32>
    %21 = arith.addf %20, %19 : vector<2x128xf32>
    %22 = arith.divf %20, %21 : vector<2x128xf32>
    %23 = math.tanh %17 : vector<2x128xf32>
    %24 = vector.extract_strided_slice %22 {offsets = [0, 0], sizes = [2, 32], strides = [1, 1]} : vector<2x128xf32> to vector<2x32xf32>
    %25 = vector.extract_strided_slice %22 {offsets = [0, 32], sizes = [2, 32], strides = [1, 1]} : vector<2x128xf32> to vector<2x32xf32>
    %26 = vector.extract_strided_slice %23 {offsets = [0, 64], sizes = [2, 32], strides = [1, 1]} : vector<2x128xf32> to vector<2x32xf32>
    %27 = vector.extract_strided_slice %22 {offsets = [0, 96], sizes = [2, 32], strides = [1, 1]} : vector<2x128xf32> to vector<2x32xf32>
    %28 = arith.mulf %25, %11 : vector<2x32xf32>
    %29 = arith.mulf %24, %26 : vector<2x32xf32>
    %30 = arith.addf %28, %29 : vector<2x32xf32>
    %31 = math.tanh %30 : vector<2x32xf32>
    %32 = arith.mulf %27, %31 : vector<2x32xf32>
    %33 = arith.truncf %32 : vector<2x32xf32> to vector<2x32xbf16>
    %34 = arith.index_cast %c0_i32 : i32 to index
    %c0_17 = arith.constant 0 : index
    %c0_18 = arith.constant 0 : index
    %35 = vector.load %arg11[%34, %c0_17, %c0_18] : memref<8x2x32xbf16, #tpu.memory_space<vmem>>, vector<1x2x32xbf16>
    %36 = vector.shape_cast %35 : vector<1x2x32xbf16> to vector<2x32xbf16>
    %37 = vector.shape_cast %33 : vector<2x32xbf16> to vector<1x2x32xbf16>
    tpu.vector_store %arg11[%34, %c0_17, %c0_18], %37 {strides = array<i32>} : memref<8x2x32xbf16, #tpu.memory_space<vmem>>, vector<1x2x32xbf16>,
    %c1_i32 = arith.constant 1 : i32
    %38 = arith.index_cast %c1_i32 : i32 to index
    %c0_19 = arith.constant 0 : index
    %c0_20 = arith.constant 0 : index
    %39 = vector.load %arg10[%38, %c0_19, %c0_20] : memref<8x2x128xf32, #tpu.memory_space<vmem>>, vector<1x2x128xf32>
    %40 = vector.shape_cast %39 : vector<1x2x128xf32> to vector<2x128xf32>
    %41 = arith.truncf %32 : vector<2x32xf32> to vector<2x32xbf16>
    %cst_21 = arith.constant dense<0.000000e+00> : vector<2x128xf32>
    %42 = tpu.matmul %41, %9, %cst_21 {dimension_numbers = #tpu.dot_dimension_numbers<[1], [0], [0], [1], [0, 0, 1, 1], [], []>} : vector<2x32xbf16>, vector<32x128xbf16>, vector<2x128xf32> -> vector<2x128xf32>
    %43 = arith.addf %40, %42 : vector<2x128xf32>
    %44 = arith.negf %43 : vector<2x128xf32>
    %45 = math.exp %44 : vector<2x128xf32>
    %cst_22 = arith.constant 1.000000e+00 : f32
    %46 = vector.broadcast %cst_22 : f32 to vector<2x128xf32>
    %47 = arith.addf %46, %45 : vector<2x128xf32>
    %48 = arith.divf %46, %47 : vector<2x128xf32>
    %49 = math.tanh %43 : vector<2x128xf32>
    %50 = vector.extract_strided_slice %48 {offsets = [0, 0], sizes = [2, 32], strides = [1, 1]} : vector<2x128xf32> to vector<2x32xf32>
    %51 = vector.extract_strided_slice %48 {offsets = [0, 32], sizes = [2, 32], strides = [1, 1]} : vector<2x128xf32> to vector<2x32xf32>
    %52 = vector.extract_strided_slice %49 {offsets = [0, 64], sizes = [2, 32], strides = [1, 1]} : vector<2x128xf32> to vector<2x32xf32>
    %53 = vector.extract_strided_slice %48 {offsets = [0, 96], sizes = [2, 32], strides = [1, 1]} : vector<2x128xf32> to vector<2x32xf32>
    %54 = arith.mulf %51, %30 : vector<2x32xf32>
    %55 = arith.mulf %50, %52 : vector<2x32xf32>
    %56 = arith.addf %54, %55 : vector<2x32xf32>
    %57 = math.tanh %56 : vector<2x32xf32>
    %58 = arith.mulf %53, %57 : vector<2x32xf32>
    %59 = arith.truncf %58 : vector<2x32xf32> to vector<2x32xbf16>
    %60 = arith.index_cast %c1_i32 : i32 to index
    %c0_23 = arith.constant 0 : index
    %c0_24 = arith.constant 0 : index
    %61 = vector.load %arg11[%60, %c0_23, %c0_24] : memref<8x2x32xbf16, #tpu.memory_space<vmem>>, vector<1x2x32xbf16>
    %62 = vector.shape_cast %61 : vector<1x2x32xbf16> to vector<2x32xbf16>
    %63 = vector.shape_cast %59 : vector<2x32xbf16> to vector<1x2x32xbf16>
    tpu.vector_store %arg11[%60, %c0_23, %c0_24], %63 {strides = array<i32>} : memref<8x2x32xbf16, #tpu.memory_space<vmem>>, vector<1x2x32xbf16>,
    %c2_i32 = arith.constant 2 : i32
    %64 = arith.index_cast %c2_i32 : i32 to index
    %c0_25 = arith.constant 0 : index
    %c0_26 = arith.constant 0 : index
    %65 = vector.load %arg10[%64, %c0_25, %c0_26] : memref<8x2x128xf32, #tpu.memory_space<vmem>>, vector<1x2x128xf32>
    %66 = vector.shape_cast %65 : vector<1x2x128xf32> to vector<2x128xf32>
    %67 = arith.truncf %58 : vector<2x32xf32> to vector<2x32xbf16>
    %cst_27 = arith.constant dense<0.000000e+00> : vector<2x128xf32>
    %68 = tpu.matmul %67, %9, %cst_27 {dimension_numbers = #tpu.dot_dimension_numbers<[1], [0], [0], [1], [0, 0, 1, 1], [], []>} : vector<2x32xbf16>, vector<32x128xbf16>, vector<2x128xf32> -> vector<2x128xf32>
    %69 = arith.addf %66, %68 : vector<2x128xf32>
    %70 = arith.negf %69 : vector<2x128xf32>
    %71 = math.exp %70 : vector<2x128xf32>
    %cst_28 = arith.constant 1.000000e+00 : f32
    %72 = vector.broadcast %cst_28 : f32 to vector<2x128xf32>
    %73 = arith.addf %72, %71 : vector<2x128xf32>
    %74 = arith.divf %72, %73 : vector<2x128xf32>
    %75 = math.tanh %69 : vector<2x128xf32>
    %76 = vector.extract_strided_slice %74 {offsets = [0, 0], sizes = [2, 32], strides = [1, 1]} : vector<2x128xf32> to vector<2x32xf32>
    %77 = vector.extract_strided_slice %74 {offsets = [0, 32], sizes = [2, 32], strides = [1, 1]} : vector<2x128xf32> to vector<2x32xf32>
    %78 = vector.extract_strided_slice %75 {offsets = [0, 64], sizes = [2, 32], strides = [1, 1]} : vector<2x128xf32> to vector<2x32xf32>
    %79 = vector.extract_strided_slice %74 {offsets = [0, 96], sizes = [2, 32], strides = [1, 1]} : vector<2x128xf32> to vector<2x32xf32>
    %80 = arith.mulf %77, %56 : vector<2x32xf32>
    %81 = arith.mulf %76, %78 : vector<2x32xf32>
    %82 = arith.addf %80, %81 : vector<2x32xf32>
    %83 = math.tanh %82 : vector<2x32xf32>
    %84 = arith.mulf %79, %83 : vector<2x32xf32>
    %85 = arith.truncf %84 : vector<2x32xf32> to vector<2x32xbf16>
    %86 = arith.index_cast %c2_i32 : i32 to index
    %c0_29 = arith.constant 0 : index
    %c0_30 = arith.constant 0 : index
    %87 = vector.load %arg11[%86, %c0_29, %c0_30] : memref<8x2x32xbf16, #tpu.memory_space<vmem>>, vector<1x2x32xbf16>
    %88 = vector.shape_cast %87 : vector<1x2x32xbf16> to vector<2x32xbf16>
    %89 = vector.shape_cast %85 : vector<2x32xbf16> to vector<1x2x32xbf16>
    tpu.vector_store %arg11[%86, %c0_29, %c0_30], %89 {strides = array<i32>} : memref<8x2x32xbf16, #tpu.memory_space<vmem>>, vector<1x2x32xbf16>,
    %c3_i32 = arith.constant 3 : i32
    %90 = arith.index_cast %c3_i32 : i32 to index
    %c0_31 = arith.constant 0 : index
    %c0_32 = arith.constant 0 : index
    %91 = vector.load %arg10[%90, %c0_31, %c0_32] : memref<8x2x128xf32, #tpu.memory_space<vmem>>, vector<1x2x128xf32>
    %92 = vector.shape_cast %91 : vector<1x2x128xf32> to vector<2x128xf32>
    %93 = arith.truncf %84 : vector<2x32xf32> to vector<2x32xbf16>
    %cst_33 = arith.constant dense<0.000000e+00> : vector<2x128xf32>
    %94 = tpu.matmul %93, %9, %cst_33 {dimension_numbers = #tpu.dot_dimension_numbers<[1], [0], [0], [1], [0, 0, 1, 1], [], []>} : vector<2x32xbf16>, vector<32x128xbf16>, vector<2x128xf32> -> vector<2x128xf32>
    %95 = arith.addf %92, %94 : vector<2x128xf32>
    %96 = arith.negf %95 : vector<2x128xf32>
    %97 = math.exp %96 : vector<2x128xf32>
    %cst_34 = arith.constant 1.000000e+00 : f32
    %98 = vector.broadcast %cst_34 : f32 to vector<2x128xf32>
    %99 = arith.addf %98, %97 : vector<2x128xf32>
    %100 = arith.divf %98, %99 : vector<2x128xf32>
    %101 = math.tanh %95 : vector<2x128xf32>
    %102 = vector.extract_strided_slice %100 {offsets = [0, 0], sizes = [2, 32], strides = [1, 1]} : vector<2x128xf32> to vector<2x32xf32>
    %103 = vector.extract_strided_slice %100 {offsets = [0, 32], sizes = [2, 32], strides = [1, 1]} : vector<2x128xf32> to vector<2x32xf32>
    %104 = vector.extract_strided_slice %101 {offsets = [0, 64], sizes = [2, 32], strides = [1, 1]} : vector<2x128xf32> to vector<2x32xf32>
    %105 = vector.extract_strided_slice %100 {offsets = [0, 96], sizes = [2, 32], strides = [1, 1]} : vector<2x128xf32> to vector<2x32xf32>
    %106 = arith.mulf %103, %82 : vector<2x32xf32>
    %107 = arith.mulf %102, %104 : vector<2x32xf32>
    %108 = arith.addf %106, %107 : vector<2x32xf32>
    %109 = math.tanh %108 : vector<2x32xf32>
    %110 = arith.mulf %105, %109 : vector<2x32xf32>
    %111 = arith.truncf %110 : vector<2x32xf32> to vector<2x32xbf16>
    %112 = arith.index_cast %c3_i32 : i32 to index
    %c0_35 = arith.constant 0 : index
    %c0_36 = arith.constant 0 : index
    %113 = vector.load %arg11[%112, %c0_35, %c0_36] : memref<8x2x32xbf16, #tpu.memory_space<vmem>>, vector<1x2x32xbf16>
    %114 = vector.shape_cast %113 : vector<1x2x32xbf16> to vector<2x32xbf16>
    %115 = vector.shape_cast %111 : vector<2x32xbf16> to vector<1x2x32xbf16>
    tpu.vector_store %arg11[%112, %c0_35, %c0_36], %115 {strides = array<i32>} : memref<8x2x32xbf16, #tpu.memory_space<vmem>>, vector<1x2x32xbf16>,
    %c4_i32 = arith.constant 4 : i32
    %116 = arith.index_cast %c4_i32 : i32 to index
    %c0_37 = arith.constant 0 : index
    %c0_38 = arith.constant 0 : index
    %117 = vector.load %arg10[%116, %c0_37, %c0_38] : memref<8x2x128xf32, #tpu.memory_space<vmem>>, vector<1x2x128xf32>
    %118 = vector.shape_cast %117 : vector<1x2x128xf32> to vector<2x128xf32>
    %119 = arith.truncf %110 : vector<2x32xf32> to vector<2x32xbf16>
    %cst_39 = arith.constant dense<0.000000e+00> : vector<2x128xf32>
    %120 = tpu.matmul %119, %9, %cst_39 {dimension_numbers = #tpu.dot_dimension_numbers<[1], [0], [0], [1], [0, 0, 1, 1], [], []>} : vector<2x32xbf16>, vector<32x128xbf16>, vector<2x128xf32> -> vector<2x128xf32>
    %121 = arith.addf %118, %120 : vector<2x128xf32>
    %122 = arith.negf %121 : vector<2x128xf32>
    %123 = math.exp %122 : vector<2x128xf32>
    %cst_40 = arith.constant 1.000000e+00 : f32
    %124 = vector.broadcast %cst_40 : f32 to vector<2x128xf32>
    %125 = arith.addf %124, %123 : vector<2x128xf32>
    %126 = arith.divf %124, %125 : vector<2x128xf32>
    %127 = math.tanh %121 : vector<2x128xf32>
    %128 = vector.extract_strided_slice %126 {offsets = [0, 0], sizes = [2, 32], strides = [1, 1]} : vector<2x128xf32> to vector<2x32xf32>
    %129 = vector.extract_strided_slice %126 {offsets = [0, 32], sizes = [2, 32], strides = [1, 1]} : vector<2x128xf32> to vector<2x32xf32>
    %130 = vector.extract_strided_slice %127 {offsets = [0, 64], sizes = [2, 32], strides = [1, 1]} : vector<2x128xf32> to vector<2x32xf32>
    %131 = vector.extract_strided_slice %126 {offsets = [0, 96], sizes = [2, 32], strides = [1, 1]} : vector<2x128xf32> to vector<2x32xf32>
    %132 = arith.mulf %129, %108 : vector<2x32xf32>
    %133 = arith.mulf %128, %130 : vector<2x32xf32>
    %134 = arith.addf %132, %133 : vector<2x32xf32>
    %135 = math.tanh %134 : vector<2x32xf32>
    %136 = arith.mulf %131, %135 : vector<2x32xf32>
    %137 = arith.truncf %136 : vector<2x32xf32> to vector<2x32xbf16>
    %138 = arith.index_cast %c4_i32 : i32 to index
    %c0_41 = arith.constant 0 : index
    %c0_42 = arith.constant 0 : index
    %139 = vector.load %arg11[%138, %c0_41, %c0_42] : memref<8x2x32xbf16, #tpu.memory_space<vmem>>, vector<1x2x32xbf16>
    %140 = vector.shape_cast %139 : vector<1x2x32xbf16> to vector<2x32xbf16>
    %141 = vector.shape_cast %137 : vector<2x32xbf16> to vector<1x2x32xbf16>
    tpu.vector_store %arg11[%138, %c0_41, %c0_42], %141 {strides = array<i32>} : memref<8x2x32xbf16, #tpu.memory_space<vmem>>, vector<1x2x32xbf16>,
    %c5_i32 = arith.constant 5 : i32
    %142 = arith.index_cast %c5_i32 : i32 to index
    %c0_43 = arith.constant 0 : index
    %c0_44 = arith.constant 0 : index
    %143 = vector.load %arg10[%142, %c0_43, %c0_44] : memref<8x2x128xf32, #tpu.memory_space<vmem>>, vector<1x2x128xf32>
    %144 = vector.shape_cast %143 : vector<1x2x128xf32> to vector<2x128xf32>
    %145 = arith.truncf %136 : vector<2x32xf32> to vector<2x32xbf16>
    %cst_45 = arith.constant dense<0.000000e+00> : vector<2x128xf32>
    %146 = tpu.matmul %145, %9, %cst_45 {dimension_numbers = #tpu.dot_dimension_numbers<[1], [0], [0], [1], [0, 0, 1, 1], [], []>} : vector<2x32xbf16>, vector<32x128xbf16>, vector<2x128xf32> -> vector<2x128xf32>
    %147 = arith.addf %144, %146 : vector<2x128xf32>
    %148 = arith.negf %147 : vector<2x128xf32>
    %149 = math.exp %148 : vector<2x128xf32>
    %cst_46 = arith.constant 1.000000e+00 : f32
    %150 = vector.broadcast %cst_46 : f32 to vector<2x128xf32>
    %151 = arith.addf %150, %149 : vector<2x128xf32>
    %152 = arith.divf %150, %151 : vector<2x128xf32>
    %153 = math.tanh %147 : vector<2x128xf32>
    %154 = vector.extract_strided_slice %152 {offsets = [0, 0], sizes = [2, 32], strides = [1, 1]} : vector<2x128xf32> to vector<2x32xf32>
    %155 = vector.extract_strided_slice %152 {offsets = [0, 32], sizes = [2, 32], strides = [1, 1]} : vector<2x128xf32> to vector<2x32xf32>
    %156 = vector.extract_strided_slice %153 {offsets = [0, 64], sizes = [2, 32], strides = [1, 1]} : vector<2x128xf32> to vector<2x32xf32>
    %157 = vector.extract_strided_slice %152 {offsets = [0, 96], sizes = [2, 32], strides = [1, 1]} : vector<2x128xf32> to vector<2x32xf32>
    %158 = arith.mulf %155, %134 : vector<2x32xf32>
    %159 = arith.mulf %154, %156 : vector<2x32xf32>
    %160 = arith.addf %158, %159 : vector<2x32xf32>
    %161 = math.tanh %160 : vector<2x32xf32>
    %162 = arith.mulf %157, %161 : vector<2x32xf32>
    %163 = arith.truncf %162 : vector<2x32xf32> to vector<2x32xbf16>
    %164 = arith.index_cast %c5_i32 : i32 to index
    %c0_47 = arith.constant 0 : index
    %c0_48 = arith.constant 0 : index
    %165 = vector.load %arg11[%164, %c0_47, %c0_48] : memref<8x2x32xbf16, #tpu.memory_space<vmem>>, vector<1x2x32xbf16>
    %166 = vector.shape_cast %165 : vector<1x2x32xbf16> to vector<2x32xbf16>
    %167 = vector.shape_cast %163 : vector<2x32xbf16> to vector<1x2x32xbf16>
    tpu.vector_store %arg11[%164, %c0_47, %c0_48], %167 {strides = array<i32>} : memref<8x2x32xbf16, #tpu.memory_space<vmem>>, vector<1x2x32xbf16>,
    %c6_i32 = arith.constant 6 : i32
    %168 = arith.index_cast %c6_i32 : i32 to index
    %c0_49 = arith.constant 0 : index
    %c0_50 = arith.constant 0 : index
    %169 = vector.load %arg10[%168, %c0_49, %c0_50] : memref<8x2x128xf32, #tpu.memory_space<vmem>>, vector<1x2x128xf32>
    %170 = vector.shape_cast %169 : vector<1x2x128xf32> to vector<2x128xf32>
    %171 = arith.truncf %162 : vector<2x32xf32> to vector<2x32xbf16>
    %cst_51 = arith.constant dense<0.000000e+00> : vector<2x128xf32>
    %172 = tpu.matmul %171, %9, %cst_51 {dimension_numbers = #tpu.dot_dimension_numbers<[1], [0], [0], [1], [0, 0, 1, 1], [], []>} : vector<2x32xbf16>, vector<32x128xbf16>, vector<2x128xf32> -> vector<2x128xf32>
    %173 = arith.addf %170, %172 : vector<2x128xf32>
    %174 = arith.negf %173 : vector<2x128xf32>
    %175 = math.exp %174 : vector<2x128xf32>
    %cst_52 = arith.constant 1.000000e+00 : f32
    %176 = vector.broadcast %cst_52 : f32 to vector<2x128xf32>
    %177 = arith.addf %176, %175 : vector<2x128xf32>
    %178 = arith.divf %176, %177 : vector<2x128xf32>
    %179 = math.tanh %173 : vector<2x128xf32>
    %180 = vector.extract_strided_slice %178 {offsets = [0, 0], sizes = [2, 32], strides = [1, 1]} : vector<2x128xf32> to vector<2x32xf32>
    %181 = vector.extract_strided_slice %178 {offsets = [0, 32], sizes = [2, 32], strides = [1, 1]} : vector<2x128xf32> to vector<2x32xf32>
    %182 = vector.extract_strided_slice %179 {offsets = [0, 64], sizes = [2, 32], strides = [1, 1]} : vector<2x128xf32> to vector<2x32xf32>
    %183 = vector.extract_strided_slice %178 {offsets = [0, 96], sizes = [2, 32], strides = [1, 1]} : vector<2x128xf32> to vector<2x32xf32>
    %184 = arith.mulf %181, %160 : vector<2x32xf32>
    %185 = arith.mulf %180, %182 : vector<2x32xf32>
    %186 = arith.addf %184, %185 : vector<2x32xf32>
    %187 = math.tanh %186 : vector<2x32xf32>
    %188 = arith.mulf %183, %187 : vector<2x32xf32>
    %189 = arith.truncf %188 : vector<2x32xf32> to vector<2x32xbf16>
    %190 = arith.index_cast %c6_i32 : i32 to index
    %c0_53 = arith.constant 0 : index
    %c0_54 = arith.constant 0 : index
    %191 = vector.load %arg11[%190, %c0_53, %c0_54] : memref<8x2x32xbf16, #tpu.memory_space<vmem>>, vector<1x2x32xbf16>
    %192 = vector.shape_cast %191 : vector<1x2x32xbf16> to vector<2x32xbf16>
    %193 = vector.shape_cast %189 : vector<2x32xbf16> to vector<1x2x32xbf16>
    tpu.vector_store %arg11[%190, %c0_53, %c0_54], %193 {strides = array<i32>} : memref<8x2x32xbf16, #tpu.memory_space<vmem>>, vector<1x2x32xbf16>,
    %c7_i32 = arith.constant 7 : i32
    %194 = arith.index_cast %c7_i32 : i32 to index
    %c0_55 = arith.constant 0 : index
    %c0_56 = arith.constant 0 : index
    %195 = vector.load %arg10[%194, %c0_55, %c0_56] : memref<8x2x128xf32, #tpu.memory_space<vmem>>, vector<1x2x128xf32>
    %196 = vector.shape_cast %195 : vector<1x2x128xf32> to vector<2x128xf32>
    %197 = arith.truncf %188 : vector<2x32xf32> to vector<2x32xbf16>
    %cst_57 = arith.constant dense<0.000000e+00> : vector<2x128xf32>
    %198 = tpu.matmul %197, %9, %cst_57 {dimension_numbers = #tpu.dot_dimension_numbers<[1], [0], [0], [1], [0, 0, 1, 1], [], []>} : vector<2x32xbf16>, vector<32x128xbf16>, vector<2x128xf32> -> vector<2x128xf32>
    %199 = arith.addf %196, %198 : vector<2x128xf32>
    %200 = arith.negf %199 : vector<2x128xf32>
    %201 = math.exp %200 : vector<2x128xf32>
    %cst_58 = arith.constant 1.000000e+00 : f32
    %202 = vector.broadcast %cst_58 : f32 to vector<2x128xf32>
    %203 = arith.addf %202, %201 : vector<2x128xf32>
    %204 = arith.divf %202, %203 : vector<2x128xf32>
    %205 = math.tanh %199 : vector<2x128xf32>
    %206 = vector.extract_strided_slice %204 {offsets = [0, 0], sizes = [2, 32], strides = [1, 1]} : vector<2x128xf32> to vector<2x32xf32>
    %207 = vector.extract_strided_slice %204 {offsets = [0, 32], sizes = [2, 32], strides = [1, 1]} : vector<2x128xf32> to vector<2x32xf32>
    %208 = vector.extract_strided_slice %205 {offsets = [0, 64], sizes = [2, 32], strides = [1, 1]} : vector<2x128xf32> to vector<2x32xf32>
    %209 = vector.extract_strided_slice %204 {offsets = [0, 96], sizes = [2, 32], strides = [1, 1]} : vector<2x128xf32> to vector<2x32xf32>
    %210 = arith.mulf %207, %186 : vector<2x32xf32>
    %211 = arith.mulf %206, %208 : vector<2x32xf32>
    %212 = arith.addf %210, %211 : vector<2x32xf32>
    %213 = math.tanh %212 : vector<2x32xf32>
    %214 = arith.mulf %209, %213 : vector<2x32xf32>
    %215 = arith.truncf %214 : vector<2x32xf32> to vector<2x32xbf16>
    %216 = arith.index_cast %c7_i32 : i32 to index
    %c0_59 = arith.constant 0 : index
    %c0_60 = arith.constant 0 : index
    %217 = vector.load %arg11[%216, %c0_59, %c0_60] : memref<8x2x32xbf16, #tpu.memory_space<vmem>>, vector<1x2x32xbf16>
    %218 = vector.shape_cast %217 : vector<1x2x32xbf16> to vector<2x32xbf16>
    %219 = vector.shape_cast %215 : vector<2x32xbf16> to vector<1x2x32xbf16>
    tpu.vector_store %arg11[%216, %c0_59, %c0_60], %219 {strides = array<i32>} : memref<8x2x32xbf16, #tpu.memory_space<vmem>>, vector<1x2x32xbf16>,
    %c8_i32 = arith.constant 8 : i32
    %c0_61 = arith.constant 0 : index
    %c0_62 = arith.constant 0 : index
    %c0_63 = arith.constant 0 : index
    %220 = vector.load %arg11[%c0_61, %c0_62, %c0_63] : memref<8x2x32xbf16, #tpu.memory_space<vmem>>, vector<8x2x32xbf16>
    %221 = vector.shape_cast %220 : vector<8x2x32xbf16> to vector<16x32xbf16>
    %c0_64 = arith.constant 0 : index
    %c0_65 = arith.constant 0 : index
    %222 = vector.load %arg4[%c0_64, %c0_65] : memref<32x128xbf16, #tpu.memory_space<vmem>>, vector<32x128xbf16>
    %cst_66 = arith.constant dense<0.000000e+00> : vector<16x128xf32>
    %223 = tpu.matmul %221, %222, %cst_66 {dimension_numbers = #tpu.dot_dimension_numbers<[1], [0], [0], [1], [0, 0, 1, 1], [], []>} : vector<16x32xbf16>, vector<32x128xbf16>, vector<16x128xf32> -> vector<16x128xf32>
    %c0_67 = arith.constant 0 : index
    %c0_68 = arith.constant 0 : index
    %224 = vector.load %arg6[%c0_67, %c0_68] : memref<1x128xf32, #tpu.memory_space<vmem>>, vector<1x128xf32>
    %225 = vector.broadcast %224 : vector<1x128xf32> to vector<16x128xf32>
    %226 = arith.addf %223, %225 : vector<16x128xf32>
    %227 = vector.shape_cast %226 : vector<16x128xf32> to vector<8x2x128xf32>
    %c0_69 = arith.constant 0 : index
    %c0_70 = arith.constant 0 : index
    %c0_71 = arith.constant 0 : index
    %228 = vector.load %arg10[%c0_69, %c0_70, %c0_71] : memref<8x2x128xf32, #tpu.memory_space<vmem>>, vector<8x2x128xf32>
    tpu.vector_store %arg10[%c0_69, %c0_70, %c0_71], %227 {strides = array<i32>} : memref<8x2x128xf32, #tpu.memory_space<vmem>>, vector<8x2x128xf32>,
    %c0_72 = arith.constant 0 : index
    %c0_73 = arith.constant 0 : index
    %229 = vector.load %arg5[%c0_72, %c0_73] : memref<32x128xbf16, #tpu.memory_space<vmem>>, vector<32x128xbf16>
    %cst_74 = arith.constant 0.000000e+00 : f32
    %230 = vector.broadcast %cst_74 : f32 to vector<2x32xf32>
    %cst_75 = arith.constant 0.000000e+00 : f32
    %231 = vector.broadcast %cst_75 : f32 to vector<2x32xf32>
    %c0_i32_76 = arith.constant 0 : i32
    %232 = arith.index_cast %c0_i32_76 : i32 to index
    %c0_77 = arith.constant 0 : index
    %c0_78 = arith.constant 0 : index
    %233 = vector.load %arg10[%232, %c0_77, %c0_78] : memref<8x2x128xf32, #tpu.memory_space<vmem>>, vector<1x2x128xf32>
    %234 = vector.shape_cast %233 : vector<1x2x128xf32> to vector<2x128xf32>
    %235 = arith.truncf %230 : vector<2x32xf32> to vector<2x32xbf16>
    %cst_79 = arith.constant dense<0.000000e+00> : vector<2x128xf32>
    %236 = tpu.matmul %235, %229, %cst_79 {dimension_numbers = #tpu.dot_dimension_numbers<[1], [0], [0], [1], [0, 0, 1, 1], [], []>} : vector<2x32xbf16>, vector<32x128xbf16>, vector<2x128xf32> -> vector<2x128xf32>
    %237 = arith.addf %234, %236 : vector<2x128xf32>
    %238 = arith.negf %237 : vector<2x128xf32>
    %239 = math.exp %238 : vector<2x128xf32>
    %cst_80 = arith.constant 1.000000e+00 : f32
    %240 = vector.broadcast %cst_80 : f32 to vector<2x128xf32>
    %241 = arith.addf %240, %239 : vector<2x128xf32>
    %242 = arith.divf %240, %241 : vector<2x128xf32>
    %243 = math.tanh %237 : vector<2x128xf32>
    %244 = vector.extract_strided_slice %242 {offsets = [0, 0], sizes = [2, 32], strides = [1, 1]} : vector<2x128xf32> to vector<2x32xf32>
    %245 = vector.extract_strided_slice %242 {offsets = [0, 32], sizes = [2, 32], strides = [1, 1]} : vector<2x128xf32> to vector<2x32xf32>
    %246 = vector.extract_strided_slice %243 {offsets = [0, 64], sizes = [2, 32], strides = [1, 1]} : vector<2x128xf32> to vector<2x32xf32>
    %247 = vector.extract_strided_slice %242 {offsets = [0, 96], sizes = [2, 32], strides = [1, 1]} : vector<2x128xf32> to vector<2x32xf32>
    %248 = arith.mulf %245, %231 : vector<2x32xf32>
    %249 = arith.mulf %244, %246 : vector<2x32xf32>
    %250 = arith.addf %248, %249 : vector<2x32xf32>
    %251 = math.tanh %250 : vector<2x32xf32>
    %252 = arith.mulf %247, %251 : vector<2x32xf32>
    %c1_i32_81 = arith.constant 1 : i32
    %253 = arith.index_cast %c1_i32_81 : i32 to index
    %c0_82 = arith.constant 0 : index
    %c0_83 = arith.constant 0 : index
    %254 = vector.load %arg10[%253, %c0_82, %c0_83] : memref<8x2x128xf32, #tpu.memory_space<vmem>>, vector<1x2x128xf32>
    %255 = vector.shape_cast %254 : vector<1x2x128xf32> to vector<2x128xf32>
    %256 = arith.truncf %252 : vector<2x32xf32> to vector<2x32xbf16>
    %cst_84 = arith.constant dense<0.000000e+00> : vector<2x128xf32>
    %257 = tpu.matmul %256, %229, %cst_84 {dimension_numbers = #tpu.dot_dimension_numbers<[1], [0], [0], [1], [0, 0, 1, 1], [], []>} : vector<2x32xbf16>, vector<32x128xbf16>, vector<2x128xf32> -> vector<2x128xf32>
    %258 = arith.addf %255, %257 : vector<2x128xf32>
    %259 = arith.negf %258 : vector<2x128xf32>
    %260 = math.exp %259 : vector<2x128xf32>
    %cst_85 = arith.constant 1.000000e+00 : f32
    %261 = vector.broadcast %cst_85 : f32 to vector<2x128xf32>
    %262 = arith.addf %261, %260 : vector<2x128xf32>
    %263 = arith.divf %261, %262 : vector<2x128xf32>
    %264 = math.tanh %258 : vector<2x128xf32>
    %265 = vector.extract_strided_slice %263 {offsets = [0, 0], sizes = [2, 32], strides = [1, 1]} : vector<2x128xf32> to vector<2x32xf32>
    %266 = vector.extract_strided_slice %263 {offsets = [0, 32], sizes = [2, 32], strides = [1, 1]} : vector<2x128xf32> to vector<2x32xf32>
    %267 = vector.extract_strided_slice %264 {offsets = [0, 64], sizes = [2, 32], strides = [1, 1]} : vector<2x128xf32> to vector<2x32xf32>
    %268 = vector.extract_strided_slice %263 {offsets = [0, 96], sizes = [2, 32], strides = [1, 1]} : vector<2x128xf32> to vector<2x32xf32>
    %269 = arith.mulf %266, %250 : vector<2x32xf32>
    %270 = arith.mulf %265, %267 : vector<2x32xf32>
    %271 = arith.addf %269, %270 : vector<2x32xf32>
    %272 = math.tanh %271 : vector<2x32xf32>
    %273 = arith.mulf %268, %272 : vector<2x32xf32>
    %c2_i32_86 = arith.constant 2 : i32
    %274 = arith.index_cast %c2_i32_86 : i32 to index
    %c0_87 = arith.constant 0 : index
    %c0_88 = arith.constant 0 : index
    %275 = vector.load %arg10[%274, %c0_87, %c0_88] : memref<8x2x128xf32, #tpu.memory_space<vmem>>, vector<1x2x128xf32>
    %276 = vector.shape_cast %275 : vector<1x2x128xf32> to vector<2x128xf32>
    %277 = arith.truncf %273 : vector<2x32xf32> to vector<2x32xbf16>
    %cst_89 = arith.constant dense<0.000000e+00> : vector<2x128xf32>
    %278 = tpu.matmul %277, %229, %cst_89 {dimension_numbers = #tpu.dot_dimension_numbers<[1], [0], [0], [1], [0, 0, 1, 1], [], []>} : vector<2x32xbf16>, vector<32x128xbf16>, vector<2x128xf32> -> vector<2x128xf32>
    %279 = arith.addf %276, %278 : vector<2x128xf32>
    %280 = arith.negf %279 : vector<2x128xf32>
    %281 = math.exp %280 : vector<2x128xf32>
    %cst_90 = arith.constant 1.000000e+00 : f32
    %282 = vector.broadcast %cst_90 : f32 to vector<2x128xf32>
    %283 = arith.addf %282, %281 : vector<2x128xf32>
    %284 = arith.divf %282, %283 : vector<2x128xf32>
    %285 = math.tanh %279 : vector<2x128xf32>
    %286 = vector.extract_strided_slice %284 {offsets = [0, 0], sizes = [2, 32], strides = [1, 1]} : vector<2x128xf32> to vector<2x32xf32>
    %287 = vector.extract_strided_slice %284 {offsets = [0, 32], sizes = [2, 32], strides = [1, 1]} : vector<2x128xf32> to vector<2x32xf32>
    %288 = vector.extract_strided_slice %285 {offsets = [0, 64], sizes = [2, 32], strides = [1, 1]} : vector<2x128xf32> to vector<2x32xf32>
    %289 = vector.extract_strided_slice %284 {offsets = [0, 96], sizes = [2, 32], strides = [1, 1]} : vector<2x128xf32> to vector<2x32xf32>
    %290 = arith.mulf %287, %271 : vector<2x32xf32>
    %291 = arith.mulf %286, %288 : vector<2x32xf32>
    %292 = arith.addf %290, %291 : vector<2x32xf32>
    %293 = math.tanh %292 : vector<2x32xf32>
    %294 = arith.mulf %289, %293 : vector<2x32xf32>
    %c3_i32_91 = arith.constant 3 : i32
    %295 = arith.index_cast %c3_i32_91 : i32 to index
    %c0_92 = arith.constant 0 : index
    %c0_93 = arith.constant 0 : index
    %296 = vector.load %arg10[%295, %c0_92, %c0_93] : memref<8x2x128xf32, #tpu.memory_space<vmem>>, vector<1x2x128xf32>
    %297 = vector.shape_cast %296 : vector<1x2x128xf32> to vector<2x128xf32>
    %298 = arith.truncf %294 : vector<2x32xf32> to vector<2x32xbf16>
    %cst_94 = arith.constant dense<0.000000e+00> : vector<2x128xf32>
    %299 = tpu.matmul %298, %229, %cst_94 {dimension_numbers = #tpu.dot_dimension_numbers<[1], [0], [0], [1], [0, 0, 1, 1], [], []>} : vector<2x32xbf16>, vector<32x128xbf16>, vector<2x128xf32> -> vector<2x128xf32>
    %300 = arith.addf %297, %299 : vector<2x128xf32>
    %301 = arith.negf %300 : vector<2x128xf32>
    %302 = math.exp %301 : vector<2x128xf32>
    %cst_95 = arith.constant 1.000000e+00 : f32
    %303 = vector.broadcast %cst_95 : f32 to vector<2x128xf32>
    %304 = arith.addf %303, %302 : vector<2x128xf32>
    %305 = arith.divf %303, %304 : vector<2x128xf32>
    %306 = math.tanh %300 : vector<2x128xf32>
    %307 = vector.extract_strided_slice %305 {offsets = [0, 0], sizes = [2, 32], strides = [1, 1]} : vector<2x128xf32> to vector<2x32xf32>
    %308 = vector.extract_strided_slice %305 {offsets = [0, 32], sizes = [2, 32], strides = [1, 1]} : vector<2x128xf32> to vector<2x32xf32>
    %309 = vector.extract_strided_slice %306 {offsets = [0, 64], sizes = [2, 32], strides = [1, 1]} : vector<2x128xf32> to vector<2x32xf32>
    %310 = vector.extract_strided_slice %305 {offsets = [0, 96], sizes = [2, 32], strides = [1, 1]} : vector<2x128xf32> to vector<2x32xf32>
    %311 = arith.mulf %308, %292 : vector<2x32xf32>
    %312 = arith.mulf %307, %309 : vector<2x32xf32>
    %313 = arith.addf %311, %312 : vector<2x32xf32>
    %314 = math.tanh %313 : vector<2x32xf32>
    %315 = arith.mulf %310, %314 : vector<2x32xf32>
    %c4_i32_96 = arith.constant 4 : i32
    %316 = arith.index_cast %c4_i32_96 : i32 to index
    %c0_97 = arith.constant 0 : index
    %c0_98 = arith.constant 0 : index
    %317 = vector.load %arg10[%316, %c0_97, %c0_98] : memref<8x2x128xf32, #tpu.memory_space<vmem>>, vector<1x2x128xf32>
    %318 = vector.shape_cast %317 : vector<1x2x128xf32> to vector<2x128xf32>
    %319 = arith.truncf %315 : vector<2x32xf32> to vector<2x32xbf16>
    %cst_99 = arith.constant dense<0.000000e+00> : vector<2x128xf32>
    %320 = tpu.matmul %319, %229, %cst_99 {dimension_numbers = #tpu.dot_dimension_numbers<[1], [0], [0], [1], [0, 0, 1, 1], [], []>} : vector<2x32xbf16>, vector<32x128xbf16>, vector<2x128xf32> -> vector<2x128xf32>
    %321 = arith.addf %318, %320 : vector<2x128xf32>
    %322 = arith.negf %321 : vector<2x128xf32>
    %323 = math.exp %322 : vector<2x128xf32>
    %cst_100 = arith.constant 1.000000e+00 : f32
    %324 = vector.broadcast %cst_100 : f32 to vector<2x128xf32>
    %325 = arith.addf %324, %323 : vector<2x128xf32>
    %326 = arith.divf %324, %325 : vector<2x128xf32>
    %327 = math.tanh %321 : vector<2x128xf32>
    %328 = vector.extract_strided_slice %326 {offsets = [0, 0], sizes = [2, 32], strides = [1, 1]} : vector<2x128xf32> to vector<2x32xf32>
    %329 = vector.extract_strided_slice %326 {offsets = [0, 32], sizes = [2, 32], strides = [1, 1]} : vector<2x128xf32> to vector<2x32xf32>
    %330 = vector.extract_strided_slice %327 {offsets = [0, 64], sizes = [2, 32], strides = [1, 1]} : vector<2x128xf32> to vector<2x32xf32>
    %331 = vector.extract_strided_slice %326 {offsets = [0, 96], sizes = [2, 32], strides = [1, 1]} : vector<2x128xf32> to vector<2x32xf32>
    %332 = arith.mulf %329, %313 : vector<2x32xf32>
    %333 = arith.mulf %328, %330 : vector<2x32xf32>
    %334 = arith.addf %332, %333 : vector<2x32xf32>
    %335 = math.tanh %334 : vector<2x32xf32>
    %336 = arith.mulf %331, %335 : vector<2x32xf32>
    %c5_i32_101 = arith.constant 5 : i32
    %337 = arith.index_cast %c5_i32_101 : i32 to index
    %c0_102 = arith.constant 0 : index
    %c0_103 = arith.constant 0 : index
    %338 = vector.load %arg10[%337, %c0_102, %c0_103] : memref<8x2x128xf32, #tpu.memory_space<vmem>>, vector<1x2x128xf32>
    %339 = vector.shape_cast %338 : vector<1x2x128xf32> to vector<2x128xf32>
    %340 = arith.truncf %336 : vector<2x32xf32> to vector<2x32xbf16>
    %cst_104 = arith.constant dense<0.000000e+00> : vector<2x128xf32>
    %341 = tpu.matmul %340, %229, %cst_104 {dimension_numbers = #tpu.dot_dimension_numbers<[1], [0], [0], [1], [0, 0, 1, 1], [], []>} : vector<2x32xbf16>, vector<32x128xbf16>, vector<2x128xf32> -> vector<2x128xf32>
    %342 = arith.addf %339, %341 : vector<2x128xf32>
    %343 = arith.negf %342 : vector<2x128xf32>
    %344 = math.exp %343 : vector<2x128xf32>
    %cst_105 = arith.constant 1.000000e+00 : f32
    %345 = vector.broadcast %cst_105 : f32 to vector<2x128xf32>
    %346 = arith.addf %345, %344 : vector<2x128xf32>
    %347 = arith.divf %345, %346 : vector<2x128xf32>
    %348 = math.tanh %342 : vector<2x128xf32>
    %349 = vector.extract_strided_slice %347 {offsets = [0, 0], sizes = [2, 32], strides = [1, 1]} : vector<2x128xf32> to vector<2x32xf32>
    %350 = vector.extract_strided_slice %347 {offsets = [0, 32], sizes = [2, 32], strides = [1, 1]} : vector<2x128xf32> to vector<2x32xf32>
    %351 = vector.extract_strided_slice %348 {offsets = [0, 64], sizes = [2, 32], strides = [1, 1]} : vector<2x128xf32> to vector<2x32xf32>
    %352 = vector.extract_strided_slice %347 {offsets = [0, 96], sizes = [2, 32], strides = [1, 1]} : vector<2x128xf32> to vector<2x32xf32>
    %353 = arith.mulf %350, %334 : vector<2x32xf32>
    %354 = arith.mulf %349, %351 : vector<2x32xf32>
    %355 = arith.addf %353, %354 : vector<2x32xf32>
    %356 = math.tanh %355 : vector<2x32xf32>
    %357 = arith.mulf %352, %356 : vector<2x32xf32>
    %c6_i32_106 = arith.constant 6 : i32
    %358 = arith.index_cast %c6_i32_106 : i32 to index
    %c0_107 = arith.constant 0 : index
    %c0_108 = arith.constant 0 : index
    %359 = vector.load %arg10[%358, %c0_107, %c0_108] : memref<8x2x128xf32, #tpu.memory_space<vmem>>, vector<1x2x128xf32>
    %360 = vector.shape_cast %359 : vector<1x2x128xf32> to vector<2x128xf32>
    %361 = arith.truncf %357 : vector<2x32xf32> to vector<2x32xbf16>
    %cst_109 = arith.constant dense<0.000000e+00> : vector<2x128xf32>
    %362 = tpu.matmul %361, %229, %cst_109 {dimension_numbers = #tpu.dot_dimension_numbers<[1], [0], [0], [1], [0, 0, 1, 1], [], []>} : vector<2x32xbf16>, vector<32x128xbf16>, vector<2x128xf32> -> vector<2x128xf32>
    %363 = arith.addf %360, %362 : vector<2x128xf32>
    %364 = arith.negf %363 : vector<2x128xf32>
    %365 = math.exp %364 : vector<2x128xf32>
    %cst_110 = arith.constant 1.000000e+00 : f32
    %366 = vector.broadcast %cst_110 : f32 to vector<2x128xf32>
    %367 = arith.addf %366, %365 : vector<2x128xf32>
    %368 = arith.divf %366, %367 : vector<2x128xf32>
    %369 = math.tanh %363 : vector<2x128xf32>
    %370 = vector.extract_strided_slice %368 {offsets = [0, 0], sizes = [2, 32], strides = [1, 1]} : vector<2x128xf32> to vector<2x32xf32>
    %371 = vector.extract_strided_slice %368 {offsets = [0, 32], sizes = [2, 32], strides = [1, 1]} : vector<2x128xf32> to vector<2x32xf32>
    %372 = vector.extract_strided_slice %369 {offsets = [0, 64], sizes = [2, 32], strides = [1, 1]} : vector<2x128xf32> to vector<2x32xf32>
    %373 = vector.extract_strided_slice %368 {offsets = [0, 96], sizes = [2, 32], strides = [1, 1]} : vector<2x128xf32> to vector<2x32xf32>
    %374 = arith.mulf %371, %355 : vector<2x32xf32>
    %375 = arith.mulf %370, %372 : vector<2x32xf32>
    %376 = arith.addf %374, %375 : vector<2x32xf32>
    %377 = math.tanh %376 : vector<2x32xf32>
    %378 = arith.mulf %373, %377 : vector<2x32xf32>
    %c7_i32_111 = arith.constant 7 : i32
    %379 = arith.index_cast %c7_i32_111 : i32 to index
    %c0_112 = arith.constant 0 : index
    %c0_113 = arith.constant 0 : index
    %380 = vector.load %arg10[%379, %c0_112, %c0_113] : memref<8x2x128xf32, #tpu.memory_space<vmem>>, vector<1x2x128xf32>
    %381 = vector.shape_cast %380 : vector<1x2x128xf32> to vector<2x128xf32>
    %382 = arith.truncf %378 : vector<2x32xf32> to vector<2x32xbf16>
    %cst_114 = arith.constant dense<0.000000e+00> : vector<2x128xf32>
    %383 = tpu.matmul %382, %229, %cst_114 {dimension_numbers = #tpu.dot_dimension_numbers<[1], [0], [0], [1], [0, 0, 1, 1], [], []>} : vector<2x32xbf16>, vector<32x128xbf16>, vector<2x128xf32> -> vector<2x128xf32>
    %384 = arith.addf %381, %383 : vector<2x128xf32>
    %385 = arith.negf %384 : vector<2x128xf32>
    %386 = math.exp %385 : vector<2x128xf32>
    %cst_115 = arith.constant 1.000000e+00 : f32
    %387 = vector.broadcast %cst_115 : f32 to vector<2x128xf32>
    %388 = arith.addf %387, %386 : vector<2x128xf32>
    %389 = arith.divf %387, %388 : vector<2x128xf32>
    %390 = math.tanh %384 : vector<2x128xf32>
    %391 = vector.extract_strided_slice %389 {offsets = [0, 0], sizes = [2, 32], strides = [1, 1]} : vector<2x128xf32> to vector<2x32xf32>
    %392 = vector.extract_strided_slice %389 {offsets = [0, 32], sizes = [2, 32], strides = [1, 1]} : vector<2x128xf32> to vector<2x32xf32>
    %393 = vector.extract_strided_slice %390 {offsets = [0, 64], sizes = [2, 32], strides = [1, 1]} : vector<2x128xf32> to vector<2x32xf32>
    %394 = vector.extract_strided_slice %389 {offsets = [0, 96], sizes = [2, 32], strides = [1, 1]} : vector<2x128xf32> to vector<2x32xf32>
    %395 = arith.mulf %392, %376 : vector<2x32xf32>
    %396 = arith.mulf %391, %393 : vector<2x32xf32>
    %397 = arith.addf %395, %396 : vector<2x32xf32>
    %398 = math.tanh %397 : vector<2x32xf32>
    %399 = arith.mulf %394, %398 : vector<2x32xf32>
    %c8_i32_116 = arith.constant 8 : i32
    %400 = arith.truncf %399 : vector<2x32xf32> to vector<2x32xbf16>
    %c0_117 = arith.constant 0 : index
    %c0_118 = arith.constant 0 : index
    %401 = vector.load %arg7[%c0_117, %c0_118] : memref<32x1xbf16, #tpu.memory_space<vmem>>, vector<32x1xbf16>
    %cst_119 = arith.constant dense<0.000000e+00> : vector<2x1xf32>
    %402 = tpu.matmul %400, %401, %cst_119 {dimension_numbers = #tpu.dot_dimension_numbers<[1], [0], [0], [1], [0, 0, 1, 1], [], []>} : vector<2x32xbf16>, vector<32x1xbf16>, vector<2x1xf32> -> vector<2x1xf32>
    %c0_120 = arith.constant 0 : index
    %c0_121 = arith.constant 0 : index
    %403 = vector.load %arg8[%c0_120, %c0_121] : memref<1x1xf32, #tpu.memory_space<vmem>>, vector<1x1xf32>
    %404 = vector.broadcast %403 : vector<1x1xf32> to vector<2x1xf32>
    %405 = arith.addf %402, %404 : vector<2x1xf32>
    %c0_122 = arith.constant 0 : index
    %c0_123 = arith.constant 0 : index
    %406 = vector.load %arg9[%c0_122, %c0_123] : memref<2x1xf32, #tpu.memory_space<vmem>>, vector<2x1xf32>
    tpu.vector_store %arg9[%c0_122, %c0_123], %405 {strides = array<i32>} : memref<2x1xf32, #tpu.memory_space<vmem>>, vector<2x1xf32>,
    return
  }
}

</mosaic_0001>

<llo_original>
// kernel: lstm_anomaly_detector.1
$region0: #{lstm_anomaly_detector.1}
  #allocation0 [shape = 'u32[]', space=smem, size = 0x4, offset = 0x4, fixed_abs, tag = 'smem constant byte address 0x4 - core index']
  #allocation1 [shape = 'u32[72,128]{1,0:T(1,128)}', space=vmem, size = 0x9000, scoped, tag = 'internal scratch']
  #allocation2 [shape = 'f32[8,2,128]{2,1,0:T(2,128)}', space=vmem, size = 0x2000, scoped, tag = 'scratch operand']
  #allocation3 [shape = 'bf16[8,2,32]{2,1,0:T(2,128)(2,1)}', space=vmem, size = 0x1000, scoped, tag = 'scratch operand']
  #allocation4 [shape = 'f32[1,1]{1,0:T(1,128)S(1)}', space=vmem, size = 0x200, scoped, tag = 'scoped memory for lstm_anomaly_detector.1']
  %s0 = inlined_call_operand.vmem [shape: bf16[8,2,4], index: 0, kind: input, shape index: {}]
  %s1 = inlined_call_operand.vmem [shape: bf16[4,128], index: 1, kind: input, shape index: {}]
  %s2 = inlined_call_operand.vmem [shape: bf16[32,128], index: 2, kind: input, shape index: {}]
  %s3 = inlined_call_operand.vmem [shape: f32[1,128], index: 3, kind: input, shape index: {}]
  %s4 = inlined_call_operand.vmem [shape: bf16[32,128], index: 4, kind: input, shape index: {}]
  %s5 = inlined_call_operand.vmem [shape: bf16[32,128], index: 5, kind: input, shape index: {}]
  %s6 = inlined_call_operand.vmem [shape: f32[1,128], index: 6, kind: input, shape index: {}]
  %s7 = inlined_call_operand.vmem [shape: bf16[32,1], index: 7, kind: input, shape index: {}]
  %s8 = inlined_call_operand.<no memory space> [shape: f32[1,1], index: 8, kind: input, shape index: {}]
  %s9 = inlined_call_operand.vmem [shape: f32[2,1], index: 9, kind: output, shape index: {}]
  %s10 = sld [smem:[#allocation0]]
  $region46: #{lstm_anomaly_detector.1} parent=0
    _
  %s12 = ssub.s32 1, %s10
  %s13 = scalar_select 0, %s12, %s10
  %v14 = vstv %s8
  %15 = vst [vmem:[#allocation4] sm:$0x1] %v14
  // Predicated region
  $region2: #{lstm_anomaly_detector.1} parent=0 // pred_check
    _
  $region3: #{lstm_anomaly_detector.1} parent=0 // pred_check_branch
    %17 = sbr.rel (0) target = $region5
  $region4: #{lstm_anomaly_detector.1} parent=0 // pred_region
    _
  $region5: #{lstm_anomaly_detector.1} parent=0 // pred_fallthru
    _
  // Predicated region
  $region6: #{lstm_anomaly_detector.1} parent=0 // pred_check
    _
  $region7: #{lstm_anomaly_detector.1} parent=0 // pred_check_branch
    %19 = sbr.rel (0) target = $region9
  $region8: #{lstm_anomaly_detector.1} parent=0 // pred_region
    _
  $region9: #{lstm_anomaly_detector.1} parent=0 // pred_fallthru
    _
  // Predicated region
  $region10: #{lstm_anomaly_detector.1} parent=0 // pred_check
    _
  $region11: #{lstm_anomaly_detector.1} parent=0 // pred_check_branch
    %21 = sbr.rel (0) target = $region13
  $region12: #{lstm_anomaly_detector.1} parent=0 // pred_region
    _
  $region13: #{lstm_anomaly_detector.1} parent=0 // pred_fallthru
    _
  // Predicated region
  $region14: #{lstm_anomaly_detector.1} parent=0 // pred_check
    _
  $region15: #{lstm_anomaly_detector.1} parent=0 // pred_check_branch
    %23 = sbr.rel (0) target = $region17
  $region16: #{lstm_anomaly_detector.1} parent=0 // pred_region
    _
  $region17: #{lstm_anomaly_detector.1} parent=0 // pred_fallthru
    _
  // Predicated region
  $region18: #{lstm_anomaly_detector.1} parent=0 // pred_check
    _
  $region19: #{lstm_anomaly_detector.1} parent=0 // pred_check_branch
    %25 = sbr.rel (0) target = $region21
  $region20: #{lstm_anomaly_detector.1} parent=0 // pred_region
    _
  $region21: #{lstm_anomaly_detector.1} parent=0 // pred_fallthru
    _
  // Predicated region
  $region22: #{lstm_anomaly_detector.1} parent=0 // pred_check
    _
  $region23: #{lstm_anomaly_detector.1} parent=0 // pred_check_branch
    %27 = sbr.rel (0) target = $region25
  $region24: #{lstm_anomaly_detector.1} parent=0 // pred_region
    _
  $region25: #{lstm_anomaly_detector.1} parent=0 // pred_fallthru
    _
  // Predicated region
  $region26: #{lstm_anomaly_detector.1} parent=0 // pred_check
    _
  $region27: #{lstm_anomaly_detector.1} parent=0 // pred_check_branch
    %29 = sbr.rel (0) target = $region29
  $region28: #{lstm_anomaly_detector.1} parent=0 // pred_region
    _
  $region29: #{lstm_anomaly_detector.1} parent=0 // pred_fallthru
    _
  // Predicated region
  $region30: #{lstm_anomaly_detector.1} parent=0 // pred_check
    _
  $region31: #{lstm_anomaly_detector.1} parent=0 // pred_check_branch
    %31 = sbr.rel (0) target = $region33
  $region32: #{lstm_anomaly_detector.1} parent=0 // pred_region
    _
  $region33: #{lstm_anomaly_detector.1} parent=0 // pred_fallthru
    _
  // Predicated region
  $region34: #{lstm_anomaly_detector.1} parent=0 // pred_check
    _
  $region35: #{lstm_anomaly_detector.1} parent=0 // pred_check_branch
    %33 = sbr.rel (0) target = $region37
  $region36: #{lstm_anomaly_detector.1} parent=0 // pred_region
    _
  $region37: #{lstm_anomaly_detector.1} parent=0 // pred_fallthru
    _
  %v35 = vld [vmem:[%s0] sm:$0x1]
  %v36 = vld [vmem:[%s0 + $0x1] sm:$0x1]
  %v37 = vld [vmem:[%s0 + $0x2] sm:$0x1]
  %v38 = vld [vmem:[%s0 + $0x3] sm:$0x1]
  %v39 = vld [vmem:[%s0 + $0x4] sm:$0x1]
  %v40 = vld [vmem:[%s0 + $0x5] sm:$0x1]
  %v41 = vld [vmem:[%s0 + $0x6] sm:$0x1]
  %v42 = vld [vmem:[%s0 + $0x7] sm:$0x1]
  %v43 = vld [vmem:[%s1] sm:$0x3]
  %v44 = vld [vmem:[%s3] sm:$0x1]
  %v46 = vperm.slane %v44, 0
  %49 = vst [vmem:[#allocation1] ss:$9 sm:$0xff] %v35
  %s51 = scalar_lea.vmem [#allocation1], 1
  %52 = vst [vmem:[%s51] ss:$9 sm:$0xff] %v36
  %s54 = scalar_lea.vmem [#allocation1], 2
  %55 = vst [vmem:[%s54] ss:$9 sm:$0xff] %v37
  %s57 = scalar_lea.vmem [#allocation1], 3
  %58 = vst [vmem:[%s57] ss:$9 sm:$0xff] %v38
  %s60 = scalar_lea.vmem [#allocation1], 4
  %61 = vst [vmem:[%s60] ss:$9 sm:$0xff] %v39
  %s63 = scalar_lea.vmem [#allocation1], 5
  %64 = vst [vmem:[%s63] ss:$9 sm:$0xff] %v40
  %s66 = scalar_lea.vmem [#allocation1], 6
  %67 = vst [vmem:[%s66] ss:$9 sm:$0xff] %v41
  %s69 = scalar_lea.vmem [#allocation1], 7
  %70 = vst [vmem:[%s69] ss:$9 sm:$0xff] %v42
  %v71 = vld [vmem:[#allocation1] sm:$0xff]
  %vm72 = vcmask 31744
  %v73 = vsel %vm72, %v71, 0
  %vm75 = vcmask 1041408
  %v77 = vsel %vm75, %v43, 0
  %79 = vmatpush.bf16.msra.mxu0 0
  %80 = vmatpush.bf16.msra.mxu0 0
  %81 = vmatpush.bf16.msra.mxu0 0
  %82 = vmatpush.bf16.msra.mxu0 0
  %83 = vmatpush.bf16.msra.mxu0 0
  %84 = vmatpush.bf16.msra.mxu0 0
  %85 = vmatpush.bf16.msra.mxu0 0
  %86 = vmatpush.bf16.msra.mxu0 %v77
  %87 = vmatmul.bf16.gmra.mxu0 %v73
  %v88 = vpop.f32.mrf.mxu0
  %v89 = vadd.f32 %v46, %v88
  %v90 = vpop.f32.mrf.mxu0
  %v91 = vadd.f32 %v46, %v90
  %92 = vdwg.mxu0
  %v95 = vrot.slane %v89, 2
  %v96 = vrot.slane %v89, 4
  %v97 = vrot.slane %v89, 6
  %v98 = vrot.slane %v91, 2
  %v99 = vrot.slane %v91, 4
  %v100 = vrot.slane %v91, 6
  %107 = vst [vmem:[#allocation2] sm:$0x3] %v89
  %108 = vst [vmem:[#allocation2 + $0x2] sm:$0x3] %v95
  %109 = vst [vmem:[#allocation2 + $0x4] sm:$0x3] %v96
  %110 = vst [vmem:[#allocation2 + $0x6] sm:$0x3] %v97
  %111 = vst [vmem:[#allocation2 + $0x8] sm:$0x3] %v91
  %112 = vst [vmem:[#allocation2 + $0xa] sm:$0x3] %v98
  %113 = vst [vmem:[#allocation2 + $0xc] sm:$0x3] %v99
  %114 = vst [vmem:[#allocation2 + $0xe] sm:$0x3] %v100
  %v115 = vld [vmem:[%s2] sm:$0xf]
  %v116 = vld [vmem:[%s2 + $0x4] sm:$0xf]
  %v117 = vld [vmem:[%s2 + $0x8] sm:$0xf]
  %v118 = vld [vmem:[%s2 + $0xc] sm:$0xf]
  %v119 = vld [vmem:[#allocation2] sm:$0x3]
  %v124 = vunpack.c.l.b16 %v115
  %v125 = vunpack.c.l.b16 %v116
  %v126 = vunpack.c.l.b16 %v117
  %v127 = vunpack.c.l.b16 %v118
  %v128 = vpack.c.b16 %v125, %v124
  %v129 = vpack.c.b16 %v127, %v126
  %vm132 = vcmask 261120
  %v134 = vsel %vm132, 0, 0
  %136 = vmatpush.bf16.msra.mxu0 0
  %137 = vmatpush.bf16.msra.mxu0 0
  %138 = vmatpush.bf16.msra.mxu0 0
  %139 = vmatpush.bf16.msra.mxu0 0
  %140 = vmatpush.bf16.msra.mxu0 0
  %141 = vmatpush.bf16.msra.mxu0 0
  %142 = vmatpush.bf16.msra.mxu0 %v129
  %143 = vmatpush.bf16.msra.mxu0 %v128
  %144 = vmatmul.bf16.gmra.mxu0 %v134
  %v145 = vpop.f32.mrf.mxu0
  %v146 = vadd.f32 0.0, %v145
  %v147 = vpop.f32.mrf.mxu0
  %148 = vdwg.mxu0
  %v149 = vadd.f32 %v119, %v146
  %v150 = vxor.u32 %v149, 2147483648
  %v151 = vmul.f32 %v150, 1.442695
  %v152 = vpow.pop %v151
  %v153 = vadd.f32 %v152, 1.0
  %v154 = vrcp.pop %v153
  %v155 = vmul.f32 %v153, %v154
  %v156 = vsub.f32 1.0, %v155
  %v157 = vmul.f32 %v154, %v156
  %v158 = vadd.f32 %v154, %v157
  %vm159 = vweird.f32 %v153
  %vm160 = vweird.f32 %v154
  %vm161 = vmor %vm159, %vm160
  %v162 = vsel %vm161, %v154, %v158
  %v163 = vand.u32 2147483647, %v153
  %vm164 = vcmp.eq.f32.partialorder %v163, 8.507059e+37
  %v165 = vand.u32 %v153, 2147483648
  %v166 = vor.u32 1.1754944e-38, %v165
  %v167 = vsel %vm164, %v166, %v162
  %v168 = vmul.f32 1.0, %v167
  %v169 = vtanh.pop %v149
  %v170 = vmul.f32 %v168, 0.0
  %172 = vrot.lane.b32.xlu0 %v169, 64
  %v173 = vpop.permute.xlu0 %172
  %v175 = vmul.f32 %v168, %v173
  %177 = vrot.lane.b32.xlu0 %v175, 32
  %v178 = vpop.permute.xlu0 %177
  %v180 = vadd.f32 %v170, %v178
  %v181 = vtanh.pop %v180
  %183 = vrot.lane.b32.xlu0 %v181, 64
  %v184 = vpop.permute.xlu0 %183
  %v186 = vmul.f32 %v168, %v184
  %v187 = vpack.c.bf16 %v186, %v186
  %v189 = vrot.slane %v187, 3
  %vm190 = vcmask 1040384
  %v193 = vsel %vm190, %v187, %v189
  %195 = vrot.lane.b32.xlu0 %v193, 32
  %v196 = vpop.permute.xlu0 %195
  %vm198 = vcmask 253952
  %199 = vst.msk [vmem:[#allocation3] sm:$0x1] %vm198, %v196
  %s200 = scalar_lea.vmem [#allocation2], 2
  %v201 = vld [vmem:[%s200] sm:$0x3]
  %v202 = vunpack.c.l.b16 %v187
  %v203 = vpack.c.b16 %v202, %v202
  %204 = vrot.lane.b32.xlu0 %v203, 32
  %v205 = vpop.permute.xlu0 %204
  %v207 = vsel %vm132, %v205, 0
  %209 = vmatpush.bf16.msra.mxu0 0
  %210 = vmatpush.bf16.msra.mxu0 0
  %211 = vmatpush.bf16.msra.mxu0 0
  %212 = vmatpush.bf16.msra.mxu0 0
  %213 = vmatpush.bf16.msra.mxu0 0
  %214 = vmatpush.bf16.msra.mxu0 0
  %215 = vmatpush.bf16.msra.mxu0 %v129
  %216 = vmatpush.bf16.msra.mxu0 %v128
  %217 = vmatmul.bf16.gmra.mxu0 %v207
  %v218 = vpop.f32.mrf.mxu0
  %v219 = vadd.f32 0.0, %v218
  %v220 = vpop.f32.mrf.mxu0
  %221 = vdwg.mxu0
  %v222 = vadd.f32 %v201, %v219
  %v223 = vxor.u32 %v222, 2147483648
  %v224 = vmul.f32 %v223, 1.442695
  %v225 = vpow.pop %v224
  %v226 = vadd.f32 %v225, 1.0
  %v227 = vrcp.pop %v226
  %v228 = vmul.f32 %v226, %v227
  %v229 = vsub.f32 1.0, %v228
  %v230 = vmul.f32 %v227, %v229
  %v231 = vadd.f32 %v227, %v230
  %vm232 = vweird.f32 %v226
  %vm233 = vweird.f32 %v227
  %vm234 = vmor %vm232, %vm233
  %v235 = vsel %vm234, %v227, %v231
  %v236 = vand.u32 2147483647, %v226
  %vm237 = vcmp.eq.f32.partialorder %v236, 8.507059e+37
  %v238 = vand.u32 %v226, 2147483648
  %v239 = vor.u32 1.1754944e-38, %v238
  %v240 = vsel %vm237, %v239, %v235
  %v241 = vmul.f32 1.0, %v240
  %v242 = vtanh.pop %v222
  %v243 = vmul.f32 %v241, %v180
  %245 = vrot.lane.b32.xlu0 %v242, 64
  %v246 = vpop.permute.xlu0 %245
  %v248 = vmul.f32 %v241, %v246
  %250 = vrot.lane.b32.xlu0 %v248, 32
  %v251 = vpop.permute.xlu0 %250
  %v253 = vadd.f32 %v243, %v251
  %v254 = vtanh.pop %v253
  %256 = vrot.lane.b32.xlu0 %v254, 64
  %v257 = vpop.permute.xlu0 %256
  %v259 = vmul.f32 %v241, %v257
  %v260 = vpack.c.bf16 %v259, %v259
  %v262 = vrot.slane %v260, 3
  %v265 = vsel %vm190, %v260, %v262
  %267 = vrot.lane.b32.xlu0 %v265, 32
  %v268 = vpop.permute.xlu0 %267
  %s270 = scalar_lea.vmem [#allocation3], 1
  %271 = vst.msk [vmem:[%s270] sm:$0x1] %vm198, %v268
  %s272 = scalar_lea.vmem [#allocation2], 4
  %v273 = vld [vmem:[%s272] sm:$0x3]
  %v274 = vunpack.c.l.b16 %v260
  %v275 = vpack.c.b16 %v274, %v274
  %276 = vrot.lane.b32.xlu0 %v275, 32
  %v277 = vpop.permute.xlu0 %276
  %v279 = vsel %vm132, %v277, 0
  %281 = vmatpush.bf16.msra.mxu0 0
  %282 = vmatpush.bf16.msra.mxu0 0
  %283 = vmatpush.bf16.msra.mxu0 0
  %284 = vmatpush.bf16.msra.mxu0 0
  %285 = vmatpush.bf16.msra.mxu0 0
  %286 = vmatpush.bf16.msra.mxu0 0
  %287 = vmatpush.bf16.msra.mxu0 %v129
  %288 = vmatpush.bf16.msra.mxu0 %v128
  %289 = vmatmul.bf16.gmra.mxu0 %v279
  %v290 = vpop.f32.mrf.mxu0
  %v291 = vadd.f32 0.0, %v290
  %v292 = vpop.f32.mrf.mxu0
  %293 = vdwg.mxu0
  %v294 = vadd.f32 %v273, %v291
  %v295 = vxor.u32 %v294, 2147483648
  %v296 = vmul.f32 %v295, 1.442695
  %v297 = vpow.pop %v296
  %v298 = vadd.f32 %v297, 1.0
  %v299 = vrcp.pop %v298
  %v300 = vmul.f32 %v298, %v299
  %v301 = vsub.f32 1.0, %v300
  %v302 = vmul.f32 %v299, %v301
  %v303 = vadd.f32 %v299, %v302
  %vm304 = vweird.f32 %v298
  %vm305 = vweird.f32 %v299
  %vm306 = vmor %vm304, %vm305
  %v307 = vsel %vm306, %v299, %v303
  %v308 = vand.u32 2147483647, %v298
  %vm309 = vcmp.eq.f32.partialorder %v308, 8.507059e+37
  %v310 = vand.u32 %v298, 2147483648
  %v311 = vor.u32 1.1754944e-38, %v310
  %v312 = vsel %vm309, %v311, %v307
  %v313 = vmul.f32 1.0, %v312
  %v314 = vtanh.pop %v294
  %v315 = vmul.f32 %v313, %v253
  %317 = vrot.lane.b32.xlu0 %v314, 64
  %v318 = vpop.permute.xlu0 %317
  %v320 = vmul.f32 %v313, %v318
  %322 = vrot.lane.b32.xlu0 %v320, 32
  %v323 = vpop.permute.xlu0 %322
  %v325 = vadd.f32 %v315, %v323
  %v326 = vtanh.pop %v325
  %328 = vrot.lane.b32.xlu0 %v326, 64
  %v329 = vpop.permute.xlu0 %328
  %v331 = vmul.f32 %v313, %v329
  %v332 = vpack.c.bf16 %v331, %v331
  %v334 = vrot.slane %v332, 3
  %v337 = vsel %vm190, %v332, %v334
  %339 = vrot.lane.b32.xlu0 %v337, 32
  %v340 = vpop.permute.xlu0 %339
  %s342 = scalar_lea.vmem [#allocation3], 2
  %343 = vst.msk [vmem:[%s342] sm:$0x1] %vm198, %v340
  %s344 = scalar_lea.vmem [#allocation2], 6
  %v345 = vld [vmem:[%s344] sm:$0x3]
  %v346 = vunpack.c.l.b16 %v332
  %v347 = vpack.c.b16 %v346, %v346
  %348 = vrot.lane.b32.xlu0 %v347, 32
  %v349 = vpop.permute.xlu0 %348
  %v351 = vsel %vm132, %v349, 0
  %353 = vmatpush.bf16.msra.mxu0 0
  %354 = vmatpush.bf16.msra.mxu0 0
  %355 = vmatpush.bf16.msra.mxu0 0
  %356 = vmatpush.bf16.msra.mxu0 0
  %357 = vmatpush.bf16.msra.mxu0 0
  %358 = vmatpush.bf16.msra.mxu0 0
  %359 = vmatpush.bf16.msra.mxu0 %v129
  %360 = vmatpush.bf16.msra.mxu0 %v128
  %361 = vmatmul.bf16.gmra.mxu0 %v351
  %v362 = vpop.f32.mrf.mxu0
  %v363 = vadd.f32 0.0, %v362
  %v364 = vpop.f32.mrf.mxu0
  %365 = vdwg.mxu0
  %v366 = vadd.f32 %v345, %v363
  %v367 = vxor.u32 %v366, 2147483648
  %v368 = vmul.f32 %v367, 1.442695
  %v369 = vpow.pop %v368
  %v370 = vadd.f32 %v369, 1.0
  %v371 = vrcp.pop %v370
  %v372 = vmul.f32 %v370, %v371
  %v373 = vsub.f32 1.0, %v372
  %v374 = vmul.f32 %v371, %v373
  %v375 = vadd.f32 %v371, %v374
  %vm376 = vweird.f32 %v370
  %vm377 = vweird.f32 %v371
  %vm378 = vmor %vm376, %vm377
  %v379 = vsel %vm378, %v371, %v375
  %v380 = vand.u32 2147483647, %v370
  %vm381 = vcmp.eq.f32.partialorder %v380, 8.507059e+37
  %v382 = vand.u32 %v370, 2147483648
  %v383 = vor.u32 1.1754944e-38, %v382
  %v384 = vsel %vm381, %v383, %v379
  %v385 = vmul.f32 1.0, %v384
  %v386 = vtanh.pop %v366
  %v387 = vmul.f32 %v385, %v325
  %389 = vrot.lane.b32.xlu0 %v386, 64
  %v390 = vpop.permute.xlu0 %389
  %v392 = vmul.f32 %v385, %v390
  %394 = vrot.lane.b32.xlu0 %v392, 32
  %v395 = vpop.permute.xlu0 %394
  %v397 = vadd.f32 %v387, %v395
  %v398 = vtanh.pop %v397
  %400 = vrot.lane.b32.xlu0 %v398, 64
  %v401 = vpop.permute.xlu0 %400
  %v403 = vmul.f32 %v385, %v401
  %v404 = vpack.c.bf16 %v403, %v403
  %v406 = vrot.slane %v404, 3
  %v409 = vsel %vm190, %v404, %v406
  %411 = vrot.lane.b32.xlu0 %v409, 32
  %v412 = vpop.permute.xlu0 %411
  %s414 = scalar_lea.vmem [#allocation3], 3
  %415 = vst.msk [vmem:[%s414] sm:$0x1] %vm198, %v412
  %s416 = scalar_lea.vmem [#allocation2], 8
  %v417 = vld [vmem:[%s416] sm:$0x3]
  %v418 = vunpack.c.l.b16 %v404
  %v419 = vpack.c.b16 %v418, %v418
  %420 = vrot.lane.b32.xlu0 %v419, 32
  %v421 = vpop.permute.xlu0 %420
  %v423 = vsel %vm132, %v421, 0
  %425 = vmatpush.bf16.msra.mxu0 0
  %426 = vmatpush.bf16.msra.mxu0 0
  %427 = vmatpush.bf16.msra.mxu0 0
  %428 = vmatpush.bf16.msra.mxu0 0
  %429 = vmatpush.bf16.msra.mxu0 0
  %430 = vmatpush.bf16.msra.mxu0 0
  %431 = vmatpush.bf16.msra.mxu0 %v129
  %432 = vmatpush.bf16.msra.mxu0 %v128
  %433 = vmatmul.bf16.gmra.mxu0 %v423
  %v434 = vpop.f32.mrf.mxu0
  %v435 = vadd.f32 0.0, %v434
  %v436 = vpop.f32.mrf.mxu0
  %437 = vdwg.mxu0
  %v438 = vadd.f32 %v417, %v435
  %v439 = vxor.u32 %v438, 2147483648
  %v440 = vmul.f32 %v439, 1.442695
  %v441 = vpow.pop %v440
  %v442 = vadd.f32 %v441, 1.0
  %v443 = vrcp.pop %v442
  %v444 = vmul.f32 %v442, %v443
  %v445 = vsub.f32 1.0, %v444
  %v446 = vmul.f32 %v443, %v445
  %v447 = vadd.f32 %v443, %v446
  %vm448 = vweird.f32 %v442
  %vm449 = vweird.f32 %v443
  %vm450 = vmor %vm448, %vm449
  %v451 = vsel %vm450, %v443, %v447
  %v452 = vand.u32 2147483647, %v442
  %vm453 = vcmp.eq.f32.partialorder %v452, 8.507059e+37
  %v454 = vand.u32 %v442, 2147483648
  %v455 = vor.u32 1.1754944e-38, %v454
  %v456 = vsel %vm453, %v455, %v451
  %v457 = vmul.f32 1.0, %v456
  %v458 = vtanh.pop %v438
  %v459 = vmul.f32 %v457, %v397
  %461 = vrot.lane.b32.xlu0 %v458, 64
  %v462 = vpop.permute.xlu0 %461
  %v464 = vmul.f32 %v457, %v462
  %466 = vrot.lane.b32.xlu0 %v464, 32
  %v467 = vpop.permute.xlu0 %466
  %v469 = vadd.f32 %v459, %v467
  %v470 = vtanh.pop %v469
  %472 = vrot.lane.b32.xlu0 %v470, 64
  %v473 = vpop.permute.xlu0 %472
  %v475 = vmul.f32 %v457, %v473
  %v476 = vpack.c.bf16 %v475, %v475
  %v478 = vrot.slane %v476, 3
  %v481 = vsel %vm190, %v476, %v478
  %483 = vrot.lane.b32.xlu0 %v481, 32
  %v484 = vpop.permute.xlu0 %483
  %s486 = scalar_lea.vmem [#allocation3], 4
  %487 = vst.msk [vmem:[%s486] sm:$0x1] %vm198, %v484
  %s488 = scalar_lea.vmem [#allocation2], 10
  %v489 = vld [vmem:[%s488] sm:$0x3]
  %v490 = vunpack.c.l.b16 %v476
  %v491 = vpack.c.b16 %v490, %v490
  %492 = vrot.lane.b32.xlu0 %v491, 32
  %v493 = vpop.permute.xlu0 %492
  %v495 = vsel %vm132, %v493, 0
  %497 = vmatpush.bf16.msra.mxu0 0
  %498 = vmatpush.bf16.msra.mxu0 0
  %499 = vmatpush.bf16.msra.mxu0 0
  %500 = vmatpush.bf16.msra.mxu0 0
  %501 = vmatpush.bf16.msra.mxu0 0
  %502 = vmatpush.bf16.msra.mxu0 0
  %503 = vmatpush.bf16.msra.mxu0 %v129
  %504 = vmatpush.bf16.msra.mxu0 %v128
  %505 = vmatmul.bf16.gmra.mxu0 %v495
  %v506 = vpop.f32.mrf.mxu0
  %v507 = vadd.f32 0.0, %v506
  %v508 = vpop.f32.mrf.mxu0
  %509 = vdwg.mxu0
  %v510 = vadd.f32 %v489, %v507
  %v511 = vxor.u32 %v510, 2147483648
  %v512 = vmul.f32 %v511, 1.442695
  %v513 = vpow.pop %v512
  %v514 = vadd.f32 %v513, 1.0
  %v515 = vrcp.pop %v514
  %v516 = vmul.f32 %v514, %v515
  %v517 = vsub.f32 1.0, %v516
  %v518 = vmul.f32 %v515, %v517
  %v519 = vadd.f32 %v515, %v518
  %vm520 = vweird.f32 %v514
  %vm521 = vweird.f32 %v515
  %vm522 = vmor %vm520, %vm521
  %v523 = vsel %vm522, %v515, %v519
  %v524 = vand.u32 2147483647, %v514
  %vm525 = vcmp.eq.f32.partialorder %v524, 8.507059e+37
  %v526 = vand.u32 %v514, 2147483648
  %v527 = vor.u32 1.1754944e-38, %v526
  %v528 = vsel %vm525, %v527, %v523
  %v529 = vmul.f32 1.0, %v528
  %v530 = vtanh.pop %v510
  %v531 = vmul.f32 %v529, %v469
  %533 = vrot.lane.b32.xlu0 %v530, 64
  %v534 = vpop.permute.xlu0 %533
  %v536 = vmul.f32 %v529, %v534
  %538 = vrot.lane.b32.xlu0 %v536, 32
  %v539 = vpop.permute.xlu0 %538
  %v541 = vadd.f32 %v531, %v539
  %v542 = vtanh.pop %v541
  %544 = vrot.lane.b32.xlu0 %v542, 64
  %v545 = vpop.permute.xlu0 %544
  %v547 = vmul.f32 %v529, %v545
  %v548 = vpack.c.bf16 %v547, %v547
  %v550 = vrot.slane %v548, 3
  %v553 = vsel %vm190, %v548, %v550
  %555 = vrot.lane.b32.xlu0 %v553, 32
  %v556 = vpop.permute.xlu0 %555
  %s558 = scalar_lea.vmem [#allocation3], 5
  %559 = vst.msk [vmem:[%s558] sm:$0x1] %vm198, %v556
  %s560 = scalar_lea.vmem [#allocation2], 12
  %v561 = vld [vmem:[%s560] sm:$0x3]
  %v562 = vunpack.c.l.b16 %v548
  %v563 = vpack.c.b16 %v562, %v562
  %564 = vrot.lane.b32.xlu0 %v563, 32
  %v565 = vpop.permute.xlu0 %564
  %v567 = vsel %vm132, %v565, 0
  %569 = vmatpush.bf16.msra.mxu0 0
  %570 = vmatpush.bf16.msra.mxu0 0
  %571 = vmatpush.bf16.msra.mxu0 0
  %572 = vmatpush.bf16.msra.mxu0 0
  %573 = vmatpush.bf16.msra.mxu0 0
  %574 = vmatpush.bf16.msra.mxu0 0
  %575 = vmatpush.bf16.msra.mxu0 %v129
  %576 = vmatpush.bf16.msra.mxu0 %v128
  %577 = vmatmul.bf16.gmra.mxu0 %v567
  %v578 = vpop.f32.mrf.mxu0
  %v579 = vadd.f32 0.0, %v578
  %v580 = vpop.f32.mrf.mxu0
  %581 = vdwg.mxu0
  %v582 = vadd.f32 %v561, %v579
  %v583 = vxor.u32 %v582, 2147483648
  %v584 = vmul.f32 %v583, 1.442695
  %v585 = vpow.pop %v584
  %v586 = vadd.f32 %v585, 1.0
  %v587 = vrcp.pop %v586
  %v588 = vmul.f32 %v586, %v587
  %v589 = vsub.f32 1.0, %v588
  %v590 = vmul.f32 %v587, %v589
  %v591 = vadd.f32 %v587, %v590
  %vm592 = vweird.f32 %v586
  %vm593 = vweird.f32 %v587
  %vm594 = vmor %vm592, %vm593
  %v595 = vsel %vm594, %v587, %v591
  %v596 = vand.u32 2147483647, %v586
  %vm597 = vcmp.eq.f32.partialorder %v596, 8.507059e+37
  %v598 = vand.u32 %v586, 2147483648
  %v599 = vor.u32 1.1754944e-38, %v598
  %v600 = vsel %vm597, %v599, %v595
  %v601 = vmul.f32 1.0, %v600
  %v602 = vtanh.pop %v582
  %v603 = vmul.f32 %v601, %v541
  %605 = vrot.lane.b32.xlu0 %v602, 64
  %v606 = vpop.permute.xlu0 %605
  %v608 = vmul.f32 %v601, %v606
  %610 = vrot.lane.b32.xlu0 %v608, 32
  %v611 = vpop.permute.xlu0 %610
  %v613 = vadd.f32 %v603, %v611
  %v614 = vtanh.pop %v613
  %616 = vrot.lane.b32.xlu0 %v614, 64
  %v617 = vpop.permute.xlu0 %616
  %v619 = vmul.f32 %v601, %v617
  %v620 = vpack.c.bf16 %v619, %v619
  %v622 = vrot.slane %v620, 3
  %v625 = vsel %vm190, %v620, %v622
  %627 = vrot.lane.b32.xlu0 %v625, 32
  %v628 = vpop.permute.xlu0 %627
  %s630 = scalar_lea.vmem [#allocation3], 6
  %631 = vst.msk [vmem:[%s630] sm:$0x1] %vm198, %v628
  %s632 = scalar_lea.vmem [#allocation2], 14
  %v633 = vld [vmem:[%s632] sm:$0x3]
  %v634 = vunpack.c.l.b16 %v620
  %v635 = vpack.c.b16 %v634, %v634
  %636 = vrot.lane.b32.xlu0 %v635, 32
  %v637 = vpop.permute.xlu0 %636
  %v639 = vsel %vm132, %v637, 0
  %641 = vmatpush.bf16.msra.mxu0 0
  %642 = vmatpush.bf16.msra.mxu0 0
  %643 = vmatpush.bf16.msra.mxu0 0
  %644 = vmatpush.bf16.msra.mxu0 0
  %645 = vmatpush.bf16.msra.mxu0 0
  %646 = vmatpush.bf16.msra.mxu0 0
  %647 = vmatpush.bf16.msra.mxu0 %v129
  %648 = vmatpush.bf16.msra.mxu0 %v128
  %649 = vmatmul.bf16.gmra.mxu0 %v639
  %v650 = vpop.f32.mrf.mxu0
  %v651 = vadd.f32 0.0, %v650
  %v652 = vpop.f32.mrf.mxu0
  %653 = vdwg.mxu0
  %v654 = vadd.f32 %v633, %v651
  %v655 = vxor.u32 %v654, 2147483648
  %v656 = vmul.f32 %v655, 1.442695
  %v657 = vpow.pop %v656
  %v658 = vadd.f32 %v657, 1.0
  %v659 = vrcp.pop %v658
  %v660 = vmul.f32 %v658, %v659
  %v661 = vsub.f32 1.0, %v660
  %v662 = vmul.f32 %v659, %v661
  %v663 = vadd.f32 %v659, %v662
  %vm664 = vweird.f32 %v658
  %vm665 = vweird.f32 %v659
  %vm666 = vmor %vm664, %vm665
  %v667 = vsel %vm666, %v659, %v663
  %v668 = vand.u32 2147483647, %v658
  %vm669 = vcmp.eq.f32.partialorder %v668, 8.507059e+37
  %v670 = vand.u32 %v658, 2147483648
  %v671 = vor.u32 1.1754944e-38, %v670
  %v672 = vsel %vm669, %v671, %v667
  %v673 = vmul.f32 1.0, %v672
  %v674 = vtanh.pop %v654
  %v675 = vmul.f32 %v673, %v613
  %677 = vrot.lane.b32.xlu0 %v674, 64
  %v678 = vpop.permute.xlu0 %677
  %v680 = vmul.f32 %v673, %v678
  %682 = vrot.lane.b32.xlu0 %v680, 32
  %v683 = vpop.permute.xlu0 %682
  %v685 = vadd.f32 %v675, %v683
  %v686 = vtanh.pop %v685
  %688 = vrot.lane.b32.xlu0 %v686, 64
  %v689 = vpop.permute.xlu0 %688
  %v691 = vmul.f32 %v673, %v689
  %v692 = vpack.c.bf16 %v691, %v691
  %v694 = vrot.slane %v692, 3
  %v697 = vsel %vm190, %v692, %v694
  %699 = vrot.lane.b32.xlu0 %v697, 32
  %v700 = vpop.permute.xlu0 %699
  %s702 = scalar_lea.vmem [#allocation3], 7
  %703 = vst.msk [vmem:[%s702] sm:$0x1] %vm198, %v700
  %v704 = vld [vmem:[#allocation3] sm:$0x1]
  %v705 = vld [vmem:[#allocation3 + $0x1] sm:$0x1]
  %v706 = vld [vmem:[#allocation3 + $0x2] sm:$0x1]
  %v707 = vld [vmem:[#allocation3 + $0x3] sm:$0x1]
  %v708 = vld [vmem:[#allocation3 + $0x4] sm:$0x1]
  %v709 = vld [vmem:[#allocation3 + $0x5] sm:$0x1]
  %v710 = vld [vmem:[#allocation3 + $0x6] sm:$0x1]
  %v711 = vld [vmem:[#allocation3 + $0x7] sm:$0x1]
  %v712 = vld [vmem:[%s4] sm:$0xf]
  %v713 = vld [vmem:[%s4 + $0x4] sm:$0xf]
  %v714 = vld [vmem:[%s4 + $0x8] sm:$0xf]
  %v715 = vld [vmem:[%s4 + $0xc] sm:$0xf]
  %v716 = vld [vmem:[%s6] sm:$0x1]
  %v718 = vperm.slane %v716, 0
  %721 = vst [vmem:[#allocation1] ss:$9 sm:$0xff] %v704
  %s723 = scalar_lea.vmem [#allocation1], 1
  %724 = vst [vmem:[%s723] ss:$9 sm:$0xff] %v705
  %s726 = scalar_lea.vmem [#allocation1], 2
  %727 = vst [vmem:[%s726] ss:$9 sm:$0xff] %v706
  %s729 = scalar_lea.vmem [#allocation1], 3
  %730 = vst [vmem:[%s729] ss:$9 sm:$0xff] %v707
  %s732 = scalar_lea.vmem [#allocation1], 4
  %733 = vst [vmem:[%s732] ss:$9 sm:$0xff] %v708
  %s735 = scalar_lea.vmem [#allocation1], 5
  %736 = vst [vmem:[%s735] ss:$9 sm:$0xff] %v709
  %s738 = scalar_lea.vmem [#allocation1], 6
  %739 = vst [vmem:[%s738] ss:$9 sm:$0xff] %v710
  %s741 = scalar_lea.vmem [#allocation1], 7
  %742 = vst [vmem:[%s741] ss:$9 sm:$0xff] %v711
  %v743 = vld [vmem:[#allocation1] sm:$0xff]
  %v748 = vunpack.c.l.b16 %v712
  %v749 = vunpack.c.l.b16 %v713
  %v750 = vunpack.c.l.b16 %v714
  %v751 = vunpack.c.l.b16 %v715
  %v752 = vpack.c.b16 %v749, %v748
  %v753 = vpack.c.b16 %v751, %v750
  %v756 = vsel %vm132, %v743, 0
  %758 = vmatpush.bf16.msra.mxu0 0
  %759 = vmatpush.bf16.msra.mxu0 0
  %760 = vmatpush.bf16.msra.mxu0 0
  %761 = vmatpush.bf16.msra.mxu0 0
  %762 = vmatpush.bf16.msra.mxu0 0
  %763 = vmatpush.bf16.msra.mxu0 0
  %764 = vmatpush.bf16.msra.mxu0 %v753
  %765 = vmatpush.bf16.msra.mxu0 %v752
  %766 = vmatmul.bf16.gmra.mxu0 %v756
  %v767 = vpop.f32.mrf.mxu0
  %v768 = vadd.f32 %v718, %v767
  %v769 = vpop.f32.mrf.mxu0
  %v770 = vadd.f32 %v718, %v769
  %771 = vdwg.mxu0
  %v774 = vrot.slane %v768, 2
  %v775 = vrot.slane %v768, 4
  %v776 = vrot.slane %v768, 6
  %v777 = vrot.slane %v770, 2
  %v778 = vrot.slane %v770, 4
  %v779 = vrot.slane %v770, 6
  %786 = vst [vmem:[#allocation2] sm:$0x3] %v768
  %787 = vst [vmem:[#allocation2 + $0x2] sm:$0x3] %v774
  %788 = vst [vmem:[#allocation2 + $0x4] sm:$0x3] %v775
  %789 = vst [vmem:[#allocation2 + $0x6] sm:$0x3] %v776
  %790 = vst [vmem:[#allocation2 + $0x8] sm:$0x3] %v770
  %791 = vst [vmem:[#allocation2 + $0xa] sm:$0x3] %v777
  %792 = vst [vmem:[#allocation2 + $0xc] sm:$0x3] %v778
  %793 = vst [vmem:[#allocation2 + $0xe] sm:$0x3] %v779
  %v794 = vld [vmem:[%s5] sm:$0xf]
  %v795 = vld [vmem:[%s5 + $0x4] sm:$0xf]
  %v796 = vld [vmem:[%s5 + $0x8] sm:$0xf]
  %v797 = vld [vmem:[%s5 + $0xc] sm:$0xf]
  %v798 = vld [vmem:[#allocation2] sm:$0x3]
  %v803 = vunpack.c.l.b16 %v794
  %v804 = vunpack.c.l.b16 %v795
  %v805 = vunpack.c.l.b16 %v796
  %v806 = vunpack.c.l.b16 %v797
  %v807 = vpack.c.b16 %v804, %v803
  %v808 = vpack.c.b16 %v806, %v805
  %811 = vmatpush.bf16.msra.mxu0 0
  %812 = vmatpush.bf16.msra.mxu0 0
  %813 = vmatpush.bf16.msra.mxu0 0
  %814 = vmatpush.bf16.msra.mxu0 0
  %815 = vmatpush.bf16.msra.mxu0 0
  %816 = vmatpush.bf16.msra.mxu0 0
  %817 = vmatpush.bf16.msra.mxu0 %v808
  %818 = vmatpush.bf16.msra.mxu0 %v807
  %819 = vmatmul.bf16.gmra.mxu0 %v134
  %v820 = vpop.f32.mrf.mxu0
  %v821 = vadd.f32 0.0, %v820
  %v822 = vpop.f32.mrf.mxu0
  %823 = vdwg.mxu0
  %v824 = vadd.f32 %v798, %v821
  %v825 = vxor.u32 %v824, 2147483648
  %v826 = vmul.f32 %v825, 1.442695
  %v827 = vpow.pop %v826
  %v828 = vadd.f32 %v827, 1.0
  %v829 = vrcp.pop %v828
  %v830 = vmul.f32 %v828, %v829
  %v831 = vsub.f32 1.0, %v830
  %v832 = vmul.f32 %v829, %v831
  %v833 = vadd.f32 %v829, %v832
  %vm834 = vweird.f32 %v828
  %vm835 = vweird.f32 %v829
  %vm836 = vmor %vm834, %vm835
  %v837 = vsel %vm836, %v829, %v833
  %v838 = vand.u32 2147483647, %v828
  %vm839 = vcmp.eq.f32.partialorder %v838, 8.507059e+37
  %v840 = vand.u32 %v828, 2147483648
  %v841 = vor.u32 1.1754944e-38, %v840
  %v842 = vsel %vm839, %v841, %v837
  %v843 = vmul.f32 1.0, %v842
  %v844 = vtanh.pop %v824
  %v845 = vmul.f32 %v843, 0.0
  %847 = vrot.lane.b32.xlu0 %v844, 64
  %v848 = vpop.permute.xlu0 %847
  %v850 = vmul.f32 %v843, %v848
  %852 = vrot.lane.b32.xlu0 %v850, 32
  %v853 = vpop.permute.xlu0 %852
  %v855 = vadd.f32 %v845, %v853
  %v856 = vtanh.pop %v855
  %858 = vrot.lane.b32.xlu0 %v856, 64
  %v859 = vpop.permute.xlu0 %858
  %v861 = vmul.f32 %v843, %v859
  %v862 = vld [vmem:[%s200] sm:$0x3]
  %v863 = vpack.c.bf16 %v861, %v861
  %865 = vrot.lane.b32.xlu0 %v863, 32
  %v866 = vpop.permute.xlu0 %865
  %v868 = vsel %vm132, %v866, 0
  %870 = vmatpush.bf16.msra.mxu0 0
  %871 = vmatpush.bf16.msra.mxu0 0
  %872 = vmatpush.bf16.msra.mxu0 0
  %873 = vmatpush.bf16.msra.mxu0 0
  %874 = vmatpush.bf16.msra.mxu0 0
  %875 = vmatpush.bf16.msra.mxu0 0
  %876 = vmatpush.bf16.msra.mxu0 %v808
  %877 = vmatpush.bf16.msra.mxu0 %v807
  %878 = vmatmul.bf16.gmra.mxu0 %v868
  %v879 = vpop.f32.mrf.mxu0
  %v880 = vadd.f32 0.0, %v879
  %v881 = vpop.f32.mrf.mxu0
  %882 = vdwg.mxu0
  %v883 = vadd.f32 %v862, %v880
  %v884 = vxor.u32 %v883, 2147483648
  %v885 = vmul.f32 %v884, 1.442695
  %v886 = vpow.pop %v885
  %v887 = vadd.f32 %v886, 1.0
  %v888 = vrcp.pop %v887
  %v889 = vmul.f32 %v887, %v888
  %v890 = vsub.f32 1.0, %v889
  %v891 = vmul.f32 %v888, %v890
  %v892 = vadd.f32 %v888, %v891
  %vm893 = vweird.f32 %v887
  %vm894 = vweird.f32 %v888
  %vm895 = vmor %vm893, %vm894
  %v896 = vsel %vm895, %v888, %v892
  %v897 = vand.u32 2147483647, %v887
  %vm898 = vcmp.eq.f32.partialorder %v897, 8.507059e+37
  %v899 = vand.u32 %v887, 2147483648
  %v900 = vor.u32 1.1754944e-38, %v899
  %v901 = vsel %vm898, %v900, %v896
  %v902 = vmul.f32 1.0, %v901
  %v903 = vtanh.pop %v883
  %v904 = vmul.f32 %v902, %v855
  %906 = vrot.lane.b32.xlu0 %v903, 64
  %v907 = vpop.permute.xlu0 %906
  %v909 = vmul.f32 %v902, %v907
  %911 = vrot.lane.b32.xlu0 %v909, 32
  %v912 = vpop.permute.xlu0 %911
  %v914 = vadd.f32 %v904, %v912
  %v915 = vtanh.pop %v914
  %917 = vrot.lane.b32.xlu0 %v915, 64
  %v918 = vpop.permute.xlu0 %917
  %v920 = vmul.f32 %v902, %v918
  %v921 = vld [vmem:[%s272] sm:$0x3]
  %v922 = vpack.c.bf16 %v920, %v920
  %924 = vrot.lane.b32.xlu0 %v922, 32
  %v925 = vpop.permute.xlu0 %924
  %v927 = vsel %vm132, %v925, 0
  %929 = vmatpush.bf16.msra.mxu0 0
  %930 = vmatpush.bf16.msra.mxu0 0
  %931 = vmatpush.bf16.msra.mxu0 0
  %932 = vmatpush.bf16.msra.mxu0 0
  %933 = vmatpush.bf16.msra.mxu0 0
  %934 = vmatpush.bf16.msra.mxu0 0
  %935 = vmatpush.bf16.msra.mxu0 %v808
  %936 = vmatpush.bf16.msra.mxu0 %v807
  %937 = vmatmul.bf16.gmra.mxu0 %v927
  %v938 = vpop.f32.mrf.mxu0
  %v939 = vadd.f32 0.0, %v938
  %v940 = vpop.f32.mrf.mxu0
  %941 = vdwg.mxu0
  %v942 = vadd.f32 %v921, %v939
  %v943 = vxor.u32 %v942, 2147483648
  %v944 = vmul.f32 %v943, 1.442695
  %v945 = vpow.pop %v944
  %v946 = vadd.f32 %v945, 1.0
  %v947 = vrcp.pop %v946
  %v948 = vmul.f32 %v946, %v947
  %v949 = vsub.f32 1.0, %v948
  %v950 = vmul.f32 %v947, %v949
  %v951 = vadd.f32 %v947, %v950
  %vm952 = vweird.f32 %v946
  %vm953 = vweird.f32 %v947
  %vm954 = vmor %vm952, %vm953
  %v955 = vsel %vm954, %v947, %v951
  %v956 = vand.u32 2147483647, %v946
  %vm957 = vcmp.eq.f32.partialorder %v956, 8.507059e+37
  %v958 = vand.u32 %v946, 2147483648
  %v959 = vor.u32 1.1754944e-38, %v958
  %v960 = vsel %vm957, %v959, %v955
  %v961 = vmul.f32 1.0, %v960
  %v962 = vtanh.pop %v942
  %v963 = vmul.f32 %v961, %v914
  %965 = vrot.lane.b32.xlu0 %v962, 64
  %v966 = vpop.permute.xlu0 %965
  %v968 = vmul.f32 %v961, %v966
  %970 = vrot.lane.b32.xlu0 %v968, 32
  %v971 = vpop.permute.xlu0 %970
  %v973 = vadd.f32 %v963, %v971
  %v974 = vtanh.pop %v973
  %976 = vrot.lane.b32.xlu0 %v974, 64
  %v977 = vpop.permute.xlu0 %976
  %v979 = vmul.f32 %v961, %v977
  %v980 = vld [vmem:[%s344] sm:$0x3]
  %v981 = vpack.c.bf16 %v979, %v979
  %983 = vrot.lane.b32.xlu0 %v981, 32
  %v984 = vpop.permute.xlu0 %983
  %v986 = vsel %vm132, %v984, 0
  %988 = vmatpush.bf16.msra.mxu0 0
  %989 = vmatpush.bf16.msra.mxu0 0
  %990 = vmatpush.bf16.msra.mxu0 0
  %991 = vmatpush.bf16.msra.mxu0 0
  %992 = vmatpush.bf16.msra.mxu0 0
  %993 = vmatpush.bf16.msra.mxu0 0
  %994 = vmatpush.bf16.msra.mxu0 %v808
  %995 = vmatpush.bf16.msra.mxu0 %v807
  %996 = vmatmul.bf16.gmra.mxu0 %v986
  %v997 = vpop.f32.mrf.mxu0
  %v998 = vadd.f32 0.0, %v997
  %v999 = vpop.f32.mrf.mxu0
  %1000 = vdwg.mxu0
  %v1001 = vadd.f32 %v980, %v998
  %v1002 = vxor.u32 %v1001, 2147483648
  %v1003 = vmul.f32 %v1002, 1.442695
  %v1004 = vpow.pop %v1003
  %v1005 = vadd.f32 %v1004, 1.0
  %v1006 = vrcp.pop %v1005
  %v1007 = vmul.f32 %v1005, %v1006
  %v1008 = vsub.f32 1.0, %v1007
  %v1009 = vmul.f32 %v1006, %v1008
  %v1010 = vadd.f32 %v1006, %v1009
  %vm1011 = vweird.f32 %v1005
  %vm1012 = vweird.f32 %v1006
  %vm1013 = vmor %vm1011, %vm1012
  %v1014 = vsel %vm1013, %v1006, %v1010
  %v1015 = vand.u32 2147483647, %v1005
  %vm1016 = vcmp.eq.f32.partialorder %v1015, 8.507059e+37
  %v1017 = vand.u32 %v1005, 2147483648
  %v1018 = vor.u32 1.1754944e-38, %v1017
  %v1019 = vsel %vm1016, %v1018, %v1014
  %v1020 = vmul.f32 1.0, %v1019
  %v1021 = vtanh.pop %v1001
  %v1022 = vmul.f32 %v1020, %v973
  %1024 = vrot.lane.b32.xlu0 %v1021, 64
  %v1025 = vpop.permute.xlu0 %1024
  %v1027 = vmul.f32 %v1020, %v1025
  %1029 = vrot.lane.b32.xlu0 %v1027, 32
  %v1030 = vpop.permute.xlu0 %1029
  %v1032 = vadd.f32 %v1022, %v1030
  %v1033 = vtanh.pop %v1032
  %1035 = vrot.lane.b32.xlu0 %v1033, 64
  %v1036 = vpop.permute.xlu0 %1035
  %v1038 = vmul.f32 %v1020, %v1036
  %v1039 = vld [vmem:[%s416] sm:$0x3]
  %v1040 = vpack.c.bf16 %v1038, %v1038
  %1042 = vrot.lane.b32.xlu0 %v1040, 32
  %v1043 = vpop.permute.xlu0 %1042
  %v1045 = vsel %vm132, %v1043, 0
  %1047 = vmatpush.bf16.msra.mxu0 0
  %1048 = vmatpush.bf16.msra.mxu0 0
  %1049 = vmatpush.bf16.msra.mxu0 0
  %1050 = vmatpush.bf16.msra.mxu0 0
  %1051 = vmatpush.bf16.msra.mxu0 0
  %1052 = vmatpush.bf16.msra.mxu0 0
  %1053 = vmatpush.bf16.msra.mxu0 %v808
  %1054 = vmatpush.bf16.msra.mxu0 %v807
  %1055 = vmatmul.bf16.gmra.mxu0 %v1045
  %v1056 = vpop.f32.mrf.mxu0
  %v1057 = vadd.f32 0.0, %v1056
  %v1058 = vpop.f32.mrf.mxu0
  %1059 = vdwg.mxu0
  %v1060 = vadd.f32 %v1039, %v1057
  %v1061 = vxor.u32 %v1060, 2147483648
  %v1062 = vmul.f32 %v1061, 1.442695
  %v1063 = vpow.pop %v1062
  %v1064 = vadd.f32 %v1063, 1.0
  %v1065 = vrcp.pop %v1064
  %v1066 = vmul.f32 %v1064, %v1065
  %v1067 = vsub.f32 1.0, %v1066
  %v1068 = vmul.f32 %v1065, %v1067
  %v1069 = vadd.f32 %v1065, %v1068
  %vm1070 = vweird.f32 %v1064
  %vm1071 = vweird.f32 %v1065
  %vm1072 = vmor %vm1070, %vm1071
  %v1073 = vsel %vm1072, %v1065, %v1069
  %v1074 = vand.u32 2147483647, %v1064
  %vm1075 = vcmp.eq.f32.partialorder %v1074, 8.507059e+37
  %v1076 = vand.u32 %v1064, 2147483648
  %v1077 = vor.u32 1.1754944e-38, %v1076
  %v1078 = vsel %vm1075, %v1077, %v1073
  %v1079 = vmul.f32 1.0, %v1078
  %v1080 = vtanh.pop %v1060
  %v1081 = vmul.f32 %v1079, %v1032
  %1083 = vrot.lane.b32.xlu0 %v1080, 64
  %v1084 = vpop.permute.xlu0 %1083
  %v1086 = vmul.f32 %v1079, %v1084
  %1088 = vrot.lane.b32.xlu0 %v1086, 32
  %v1089 = vpop.permute.xlu0 %1088
  %v1091 = vadd.f32 %v1081, %v1089
  %v1092 = vtanh.pop %v1091
  %1094 = vrot.lane.b32.xlu0 %v1092, 64
  %v1095 = vpop.permute.xlu0 %1094
  %v1097 = vmul.f32 %v1079, %v1095
  %v1098 = vld [vmem:[%s488] sm:$0x3]
  %v1099 = vpack.c.bf16 %v1097, %v1097
  %1101 = vrot.lane.b32.xlu0 %v1099, 32
  %v1102 = vpop.permute.xlu0 %1101
  %v1104 = vsel %vm132, %v1102, 0
  %1106 = vmatpush.bf16.msra.mxu0 0
  %1107 = vmatpush.bf16.msra.mxu0 0
  %1108 = vmatpush.bf16.msra.mxu0 0
  %1109 = vmatpush.bf16.msra.mxu0 0
  %1110 = vmatpush.bf16.msra.mxu0 0
  %1111 = vmatpush.bf16.msra.mxu0 0
  %1112 = vmatpush.bf16.msra.mxu0 %v808
  %1113 = vmatpush.bf16.msra.mxu0 %v807
  %1114 = vmatmul.bf16.gmra.mxu0 %v1104
  %v1115 = vpop.f32.mrf.mxu0
  %v1116 = vadd.f32 0.0, %v1115
  %v1117 = vpop.f32.mrf.mxu0
  %1118 = vdwg.mxu0
  %v1119 = vadd.f32 %v1098, %v1116
  %v1120 = vxor.u32 %v1119, 2147483648
  %v1121 = vmul.f32 %v1120, 1.442695
  %v1122 = vpow.pop %v1121
  %v1123 = vadd.f32 %v1122, 1.0
  %v1124 = vrcp.pop %v1123
  %v1125 = vmul.f32 %v1123, %v1124
  %v1126 = vsub.f32 1.0, %v1125
  %v1127 = vmul.f32 %v1124, %v1126
  %v1128 = vadd.f32 %v1124, %v1127
  %vm1129 = vweird.f32 %v1123
  %vm1130 = vweird.f32 %v1124
  %vm1131 = vmor %vm1129, %vm1130
  %v1132 = vsel %vm1131, %v1124, %v1128
  %v1133 = vand.u32 2147483647, %v1123
  %vm1134 = vcmp.eq.f32.partialorder %v1133, 8.507059e+37
  %v1135 = vand.u32 %v1123, 2147483648
  %v1136 = vor.u32 1.1754944e-38, %v1135
  %v1137 = vsel %vm1134, %v1136, %v1132
  %v1138 = vmul.f32 1.0, %v1137
  %v1139 = vtanh.pop %v1119
  %v1140 = vmul.f32 %v1138, %v1091
  %1142 = vrot.lane.b32.xlu0 %v1139, 64
  %v1143 = vpop.permute.xlu0 %1142
  %v1145 = vmul.f32 %v1138, %v1143
  %1147 = vrot.lane.b32.xlu0 %v1145, 32
  %v1148 = vpop.permute.xlu0 %1147
  %v1150 = vadd.f32 %v1140, %v1148
  %v1151 = vtanh.pop %v1150
  %1153 = vrot.lane.b32.xlu0 %v1151, 64
  %v1154 = vpop.permute.xlu0 %1153
  %v1156 = vmul.f32 %v1138, %v1154
  %v1157 = vld [vmem:[%s560] sm:$0x3]
  %v1158 = vpack.c.bf16 %v1156, %v1156
  %1160 = vrot.lane.b32.xlu0 %v1158, 32
  %v1161 = vpop.permute.xlu0 %1160
  %v1163 = vsel %vm132, %v1161, 0
  %1165 = vmatpush.bf16.msra.mxu0 0
  %1166 = vmatpush.bf16.msra.mxu0 0
  %1167 = vmatpush.bf16.msra.mxu0 0
  %1168 = vmatpush.bf16.msra.mxu0 0
  %1169 = vmatpush.bf16.msra.mxu0 0
  %1170 = vmatpush.bf16.msra.mxu0 0
  %1171 = vmatpush.bf16.msra.mxu0 %v808
  %1172 = vmatpush.bf16.msra.mxu0 %v807
  %1173 = vmatmul.bf16.gmra.mxu0 %v1163
  %v1174 = vpop.f32.mrf.mxu0
  %v1175 = vadd.f32 0.0, %v1174
  %v1176 = vpop.f32.mrf.mxu0
  %1177 = vdwg.mxu0
  %v1178 = vadd.f32 %v1157, %v1175
  %v1179 = vxor.u32 %v1178, 2147483648
  %v1180 = vmul.f32 %v1179, 1.442695
  %v1181 = vpow.pop %v1180
  %v1182 = vadd.f32 %v1181, 1.0
  %v1183 = vrcp.pop %v1182
  %v1184 = vmul.f32 %v1182, %v1183
  %v1185 = vsub.f32 1.0, %v1184
  %v1186 = vmul.f32 %v1183, %v1185
  %v1187 = vadd.f32 %v1183, %v1186
  %vm1188 = vweird.f32 %v1182
  %vm1189 = vweird.f32 %v1183
  %vm1190 = vmor %vm1188, %vm1189
  %v1191 = vsel %vm1190, %v1183, %v1187
  %v1192 = vand.u32 2147483647, %v1182
  %vm1193 = vcmp.eq.f32.partialorder %v1192, 8.507059e+37
  %v1194 = vand.u32 %v1182, 2147483648
  %v1195 = vor.u32 1.1754944e-38, %v1194
  %v1196 = vsel %vm1193, %v1195, %v1191
  %v1197 = vmul.f32 1.0, %v1196
  %v1198 = vtanh.pop %v1178
  %v1199 = vmul.f32 %v1197, %v1150
  %1201 = vrot.lane.b32.xlu0 %v1198, 64
  %v1202 = vpop.permute.xlu0 %1201
  %v1204 = vmul.f32 %v1197, %v1202
  %1206 = vrot.lane.b32.xlu0 %v1204, 32
  %v1207 = vpop.permute.xlu0 %1206
  %v1209 = vadd.f32 %v1199, %v1207
  %v1210 = vtanh.pop %v1209
  %1212 = vrot.lane.b32.xlu0 %v1210, 64
  %v1213 = vpop.permute.xlu0 %1212
  %v1215 = vmul.f32 %v1197, %v1213
  %v1216 = vld [vmem:[%s632] sm:$0x3]
  %v1217 = vpack.c.bf16 %v1215, %v1215
  %1219 = vrot.lane.b32.xlu0 %v1217, 32
  %v1220 = vpop.permute.xlu0 %1219
  %v1222 = vsel %vm132, %v1220, 0
  %1224 = vmatpush.bf16.msra.mxu0 0
  %1225 = vmatpush.bf16.msra.mxu0 0
  %1226 = vmatpush.bf16.msra.mxu0 0
  %1227 = vmatpush.bf16.msra.mxu0 0
  %1228 = vmatpush.bf16.msra.mxu0 0
  %1229 = vmatpush.bf16.msra.mxu0 0
  %1230 = vmatpush.bf16.msra.mxu0 %v808
  %1231 = vmatpush.bf16.msra.mxu0 %v807
  %1232 = vmatmul.bf16.gmra.mxu0 %v1222
  %v1233 = vpop.f32.mrf.mxu0
  %v1234 = vadd.f32 0.0, %v1233
  %v1235 = vpop.f32.mrf.mxu0
  %1236 = vdwg.mxu0
  %v1237 = vadd.f32 %v1216, %v1234
  %v1238 = vxor.u32 %v1237, 2147483648
  %v1239 = vmul.f32 %v1238, 1.442695
  %v1240 = vpow.pop %v1239
  %v1241 = vadd.f32 %v1240, 1.0
  %v1242 = vrcp.pop %v1241
  %v1243 = vmul.f32 %v1241, %v1242
  %v1244 = vsub.f32 1.0, %v1243
  %v1245 = vmul.f32 %v1242, %v1244
  %v1246 = vadd.f32 %v1242, %v1245
  %vm1247 = vweird.f32 %v1241
  %vm1248 = vweird.f32 %v1242
  %vm1249 = vmor %vm1247, %vm1248
  %v1250 = vsel %vm1249, %v1242, %v1246
  %v1251 = vand.u32 2147483647, %v1241
  %vm1252 = vcmp.eq.f32.partialorder %v1251, 8.507059e+37
  %v1253 = vand.u32 %v1241, 2147483648
  %v1254 = vor.u32 1.1754944e-38, %v1253
  %v1255 = vsel %vm1252, %v1254, %v1250
  %v1256 = vmul.f32 1.0, %v1255
  %v1257 = vtanh.pop %v1237
  %v1258 = vmul.f32 %v1256, %v1209
  %1260 = vrot.lane.b32.xlu0 %v1257, 64
  %v1261 = vpop.permute.xlu0 %1260
  %v1263 = vmul.f32 %v1256, %v1261
  %1265 = vrot.lane.b32.xlu0 %v1263, 32
  %v1266 = vpop.permute.xlu0 %1265
  %v1268 = vadd.f32 %v1258, %v1266
  %v1269 = vtanh.pop %v1268
  %1271 = vrot.lane.b32.xlu0 %v1269, 64
  %v1272 = vpop.permute.xlu0 %1271
  %v1274 = vmul.f32 %v1256, %v1272
  %v1275 = vpack.c.bf16 %v1274, %v1274
  %v1276 = vld [vmem:[%s7] sm:$0xf]
  %v1277 = vld [vmem:[%s7 + $0x4] sm:$0xf]
  %v1278 = vld [vmem:[%s7 + $0x8] sm:$0xf]
  %v1279 = vld [vmem:[%s7 + $0xc] sm:$0xf]
  %v1280 = vld [vmem:[#allocation4] sm:$0x1]
  %v1282 = vperm.slane %v1280, 0
  %1285 = vrot.lane.b32.xlu0 %v1275, 32
  %v1286 = vpop.permute.xlu0 %1285
  %v1291 = vunpack.c.l.b16 %v1276
  %v1292 = vunpack.c.l.b16 %v1277
  %v1293 = vunpack.c.l.b16 %v1278
  %v1294 = vunpack.c.l.b16 %v1279
  %v1295 = vpack.c.b16 %v1292, %v1291
  %v1296 = vpack.c.b16 %v1294, %v1293
  %v1300 = vsel %vm132, %v1286, 0
  %1302 = vmatpush.bf16.msra.mxu0 0
  %1303 = vmatpush.bf16.msra.mxu0 0
  %1304 = vmatpush.bf16.msra.mxu0 0
  %1305 = vmatpush.bf16.msra.mxu0 0
  %1306 = vmatpush.bf16.msra.mxu0 0
  %1307 = vmatpush.bf16.msra.mxu0 0
  %1308 = vmatpush.bf16.msra.mxu0 %v1296
  %1309 = vmatpush.bf16.msra.mxu0 %v1295
  %1310 = vmatmul.bf16.gmra.mxu0 %v1300
  %v1311 = vpop.f32.mrf.mxu0
  %v1312 = vadd.f32 %v1282, %v1311
  %v1313 = vpop.f32.mrf.mxu0
  %1314 = vdwg.mxu0
  %vm1315 = vcmask 1024
  %1316 = vst.msk [vmem:[%s9] sm:$0x3] %vm1315, %v1312
  // Predicated region
  $region38: #{lstm_anomaly_detector.1} parent=0 // pred_check
    _
  $region39: #{lstm_anomaly_detector.1} parent=0 // pred_check_branch
    %1318 = sbr.rel (0) target = $region41
  $region40: #{lstm_anomaly_detector.1} parent=0 // pred_region
    _
  $region41: #{lstm_anomaly_detector.1} parent=0 // pred_fallthru
    _
  // Predicated region
  $region42: #{lstm_anomaly_detector.1} parent=0 // pred_check
    _
  $region43: #{lstm_anomaly_detector.1} parent=0 // pred_check_branch
    %1320 = sbr.rel (0) target = $region45
  $region44: #{lstm_anomaly_detector.1} parent=0 // pred_region
    _
  $region45: #{lstm_anomaly_detector.1} parent=0 // pred_fallthru
    _

</llo_original>
